<compile_context>
chip_gen: v7x
topology: tpu7x:2x2x1
jax: 0.10.0
libtpu: 0.0.40
codegen_flags: <defaults>
</compile_context>

<pallas_src>
import functools

import jax
import jax.numpy as jnp
from jax.experimental import pallas as pl
from jax.experimental.pallas import tpu as pltpu


# ---------------------------------------------------------------------------
# Phase 1: fused (1x1 conv + dilated 3x3 conv) as ONE im2col matmul per tile,
#          plus per-tile partial BatchNorm statistics.
# ---------------------------------------------------------------------------
def _conv_stats_kernel(xh_ref, w_ref, b_ref, y_ref, stats_ref, patch_ref,
                       *, th, wo, cin, dil):
    # im2col: pack the 9 shifted taps of the haloed tile along channels into a
    # VMEM scratch (the centre tap, kh=kw=1, is exactly the un-padded input and
    # carries block0's 1x1 weights inside the fused weight matrix).
    for kh in range(3):
        for kw in range(3):
            t = kh * 3 + kw
            patch_ref[:, :, t * cin:(t + 1) * cin] = xh_ref[
                0, 0, kh * dil: kh * dil + th, kw * dil: kw * dil + wo, :]

    patches = patch_ref[...].reshape(th * wo, 9 * cin)          # (tile_px, 9*Cin) bf16

    # Single MXU matmul -> [x0 | x1] for the whole tile (bf16 in, f32 accumulate).
    y = jnp.dot(patches, w_ref[...], preferred_element_type=jnp.float32)
    y = y + b_ref[...]                                          # (tile_px, 2*Cout) f32
    y_ref[0, 0] = y

    # Per-tile partial BN statistics: only 2*Cout channels are needed because
    # the three concatenated x1 copies share identical per-channel stats.
    stats_ref[0, 0, 0:1, :] = jnp.sum(y, axis=0, keepdims=True)
    stats_ref[0, 0, 1:2, :] = jnp.sum(y * y, axis=0, keepdims=True)


# ---------------------------------------------------------------------------
# Phase 2: apply BN affine and write the [x0, x1, x1, x1] channel concat,
#          without ever materializing the concatenated tensor as an input.
# ---------------------------------------------------------------------------
def _bn_apply_kernel(y_ref, scale_ref, shift_ref, o_ref, *, cout):
    y = y_ref[0, 0]                                             # (tile_px, 2*Cout) f32
    sc = scale_ref[...]                                         # (1, 4*Cout)
    sh = shift_ref[...]
    # channels [0 : 2*Cout]  = normalized [x0 | x1]
    o_ref[0, 0, :, 0:2 * cout] = y * sc[:, 0:2 * cout] + sh[:, 0:2 * cout]
    # channels [2*Cout : 4*Cout] = two more normalized copies of x1
    y1 = y[:, cout:]
    o_ref[0, 0, :, 2 * cout:3 * cout] = y1 * sc[:, 2 * cout:3 * cout] + sh[:, 2 * cout:3 * cout]
    o_ref[0, 0, :, 3 * cout:4 * cout] = y1 * sc[:, 3 * cout:4 * cout] + sh[:, 3 * cout:4 * cout]


# ---------------------------------------------------------------------------
# Tile sizing helpers.
# ---------------------------------------------------------------------------
def _largest_divisor_leq(n, cap):
    cap = max(1, min(n, cap))
    for d in range(cap, 0, -1):
        if n % d == 0:
            return d
    return 1


def _auto_tile_rows(H, W, Cin, Cout, dil):
    """Largest H-tile (divisor of H) whose double-buffered working set leaves
    generous headroom in scoped VMEM on every generation (v7x: 64 MiB/TC)."""
    try:
        vmem_bytes = pltpu.get_tpu_info().vmem_capacity_bytes
    except Exception:
        vmem_bytes = 64 * 1024 * 1024          # assume the smallest (v7x)
    budget = vmem_bytes // 16
    wp = W + 2 * dil
    best = 1
    for th in range(1, H + 1):
        if H % th:
            continue
        in_b = (th + 2 * dil) * wp * Cin * 2      # bf16 haloed input tile
        out_b = th * W * 2 * Cout * 4             # f32 conv-output tile
        patch_b = th * W * 9 * Cin * 2            # bf16 im2col scratch
        if 2 * (in_b + out_b) + patch_b <= budget:
            best = th
    return best


# ---------------------------------------------------------------------------
# Wrapper: NCHW in, NCHW out (matches the PyTorch module).
# ---------------------------------------------------------------------------
def pyramid_dilation_conv(x_nchw, params, *, dil=6, eps=1e-5, tile_rows=None):
    N, Cin, H, W = x_nchw.shape
    Cout = params['w0'].shape[1]
    Wp = W + 2 * dil

    # layout: NCHW -> NHWC (channels on lanes), bf16 for the MXU fast path,
    # zero-pad spatially once for the dilated conv (the centre window is reused
    # by the 1x1 conv, so x itself is not passed separately).
    x = jnp.transpose(x_nchw, (0, 2, 3, 1)).astype(jnp.bfloat16)
    xp = jnp.pad(x, ((0, 0), (dil, dil), (dil, dil), (0, 0)))

    # choose an H tile and duplicate the 2*dil halo rows per tile so the grid can
    # use plain blocked (non-overlapping) BlockSpecs with automatic pipelining.
    if tile_rows is None:
        tile_rows = _auto_tile_rows(H, W, Cin, Cout, dil)
    th = _largest_divisor_leq(H, tile_rows)
    ht = H // th
    xh = jnp.stack([xp[:, t * th: t * th + th + 2 * dil] for t in range(ht)],
                   axis=1)                                      # (N, ht, th+2d, Wp, Cin)

    # fuse block0 (1x1) and block1 (3x3, dilation=6) into ONE im2col weight:
    # column block [:, :Cout] is w0 on the centre tap only, [:, Cout:] is w1.
    w0 = params['w0'].astype(jnp.float32)                       # (Cin, Cout)
    w1 = params['w1'].astype(jnp.float32)                       # (9, Cin, Cout)
    w_x0 = jnp.zeros((9, Cin, Cout), jnp.float32).at[4].set(w0)
    w_fused = jnp.concatenate([w_x0, w1], axis=-1)              # (9, Cin, 2*Cout)
    w_fused = w_fused.reshape(9 * Cin, 2 * Cout).astype(jnp.bfloat16)
    b01 = jnp.concatenate([params['b0'], params['b1']], axis=-1).astype(jnp.float32)

    cp = pltpu.CompilerParams(
        dimension_semantics=("parallel", "parallel"),   # v7x: shard grid over both TCs
        vmem_limit_bytes=32 * 1024 * 1024)

    # ---------------- phase 1: conv + per-tile partial BN stats ----------------
    y, part = pl.pallas_call(
        functools.partial(_conv_stats_kernel, th=th, wo=W, cin=Cin, dil=dil),
        grid=(N, ht),
        in_specs=[
            pl.BlockSpec((1, 1, th + 2 * dil, Wp, Cin), lambda n, t: (n, t, 0, 0, 0)),
            pl.BlockSpec((9 * Cin, 2 * Cout), lambda n, t: (0, 0)),   # weights: DMA'd once
            pl.BlockSpec((1, 2 * Cout), lambda n, t: (0, 0)),         # biases:  DMA'd once
        ],
        out_specs=[
            pl.BlockSpec((1, 1, th * W, 2 * Cout), lambda n, t: (n, t, 0, 0)),
            pl.BlockSpec((1, 1, 2, 2 * Cout), lambda n, t: (n, t, 0, 0)),
        ],
        out_shape=[
            jax.ShapeDtypeStruct((N, ht, th * W, 2 * Cout), jnp.float32),
            jax.ShapeDtypeStruct((N, ht, 2, 2 * Cout), jnp.float32),
        ],
        scratch_shapes=[pltpu.VMEM((th, W, 9 * Cin), jnp.bfloat16)],
        compiler_params=cp,
    )(xh, w_fused, b01)

    # ------------- tiny global BN reduction (training mode, biased var) --------
    cnt = float(N * H * W)
    tot = jnp.sum(part, axis=(0, 1))                            # (2, 2*Cout)
    mean2 = tot[0] / cnt
    var2 = jnp.maximum(tot[1] / cnt - mean2 * mean2, 0.0)
    mean4 = jnp.concatenate([mean2, mean2[Cout:], mean2[Cout:]])        # [x0, x1, x1, x1]
    var4 = jnp.concatenate([var2, var2[Cout:], var2[Cout:]])
    scale = (params['gamma'] * jax.lax.rsqrt(var4 + eps)).astype(jnp.float32)   # (1, 4*Cout)
    shift = (params['beta'] - mean4 * scale).astype(jnp.float32)                # (1, 4*Cout)
    # TODO(synk): BN running_mean / running_var updates (stateful) are not modeled.

    # ---------------- phase 2: normalize + 4-way channel concat ----------------
    out_flat = pl.pallas_call(
        functools.partial(_bn_apply_kernel, cout=Cout),
        grid=(N, ht),
        in_specs=[
            pl.BlockSpec((1, 1, th * W, 2 * Cout), lambda n, t: (n, t, 0, 0)),
            pl.BlockSpec((1, 4 * Cout), lambda n, t: (0, 0)),
            pl.BlockSpec((1, 4 * Cout), lambda n, t: (0, 0)),
        ],
        out_specs=pl.BlockSpec((1, 1, th * W, 4 * Cout), lambda n, t: (n, t, 0, 0)),
        out_shape=jax.ShapeDtypeStruct((N, ht, th * W, 4 * Cout), jnp.float32),
        compiler_params=cp,
    )(y, scale, shift)

    out = out_flat.reshape(N, H, W, 4 * Cout)     # contiguous HBM reshape (free)
    return jnp.transpose(out, (0, 3, 1, 2))       # back to NCHW


# ---------------------------------------------------------------------------
# Deterministic synthetic parameters (shapes per the module __init__).
# ---------------------------------------------------------------------------
def init_params(key, inplanes, planes):
    k0, k1, k2, k3 = jax.random.split(key, 4)
    bound0 = 1.0 / jnp.sqrt(inplanes * 1 * 1)
    bound1 = 1.0 / jnp.sqrt(inplanes * 3 * 3)
    return {
        # block0: Conv2d(inplanes, planes, 1) — stored as (Cin, Cout)
        'w0': jax.random.uniform(k0, (inplanes, planes), jnp.float32, -bound0, bound0),
        'b0': jax.random.uniform(k1, (1, planes), jnp.float32, -bound0, bound0),
        # block1: Conv2d(inplanes, planes, 3, dilation=6, padding=6) — (kh*kw, Cin, Cout)
        'w1': jax.random.uniform(k2, (9, inplanes, planes), jnp.float32, -bound1, bound1),
        'b1': jax.random.uniform(k3, (1, planes), jnp.float32, -bound1, bound1),
        # BatchNorm2d(planes * 4): PyTorch default init gamma=1, beta=0
        'gamma': jnp.ones((1, 4 * planes), jnp.float32),
        'beta': jnp.zeros((1, 4 * planes), jnp.float32),
    }


# ---------------------------------------------------------------------------
# Pure-JAX reference (same bf16-input / f32-accumulate precision path).
# ---------------------------------------------------------------------------
def _reference(x_nchw, params, *, dil=6, eps=1e-5):
    N, Cin, H, W = x_nchw.shape
    Cout = params['w0'].shape[1]
    x = jnp.transpose(x_nchw, (0, 2, 3, 1)).astype(jnp.bfloat16)
    dn = ('NHWC', 'HWIO', 'NHWC')
    w0 = params['w0'].astype(jnp.bfloat16)[None, None]            # (1,1,Cin,Cout)
    w1 = params['w1'].reshape(3, 3, Cin, Cout).astype(jnp.bfloat16)
    x0 = jax.lax.conv_general_dilated(
        x, w0, (1, 1), 'VALID', dimension_numbers=dn,
        preferred_element_type=jnp.float32) + params['b0'][0]
    x1 = jax.lax.conv_general_dilated(
        x, w1, (1, 1), [(dil, dil), (dil, dil)], rhs_dilation=(dil, dil),
        dimension_numbers=dn, preferred_element_type=jnp.float32) + params['b1'][0]
    cat = jnp.concatenate([x0, x1, x1, x1], axis=-1)
    mean = cat.mean(axis=(0, 1, 2), keepdims=True)
    var = ((cat - mean) ** 2).mean(axis=(0, 1, 2), keepdims=True)
    out = (cat - mean) * jax.lax.rsqrt(var + eps) * params['gamma'][0] + params['beta'][0]
    return jnp.transpose(out, (0, 3, 1, 2))


if __name__ == "__main__":
    key = jax.random.PRNGKey(0)
    kx, kp = jax.random.split(key)

    N, inplanes, planes, H, W = 2, 4, 4, 16, 16
    x = jax.random.normal(kx, (N, inplanes, H, W), jnp.float32)
    params = init_params(kp, inplanes, planes)

    # tile_rows=8 exercises the full (N, H-tiles) = (2, 2) pipelined grid.
    fn = jax.jit(functools.partial(pyramid_dilation_conv, tile_rows=8))
    out = jax.block_until_ready(fn(x, params))

    ref = jax.block_until_ready(_reference(x, params))
    assert out.shape == (N, 4 * planes, H, W), out.shape
    err = float(jnp.max(jnp.abs(out - ref)))
    assert err < 2e-3, err

    print("KERNEL_OK")
</pallas_src>

<mosaic_0001>
module attributes {stable_mosaic.version = 11 : i64} {
  func.func @_conv_stats_kernel(%arg0: i32, %arg1: i32, %arg2: memref<1x1x20x28x4xbf16, #tpu.memory_space<vmem>>, %arg3: memref<36x8xbf16, #tpu.memory_space<vmem>>, %arg4: memref<1x8xf32, #tpu.memory_space<vmem>>, %arg5: memref<1x1x128x8xf32, #tpu.memory_space<vmem>>, %arg6: memref<1x1x2x8xf32, #tpu.memory_space<vmem>>, %arg7: memref<8x16x36xbf16, #tpu.memory_space<vmem>>) attributes {dimension_semantics = [#tpu.dimension_semantics<parallel>, #tpu.dimension_semantics<parallel>], iteration_bounds = array<i64: 2, 2>, scalar_prefetch = 0 : i64, scratch_operands = 1 : i64, tpu.core_type = #tpu.core_type<tc>, window_params = [{transform_indices = @transform_0, window_bounds = array<i64: 1, 1, 20, 28, 4>}, {pipeline_mode = #tpu.pipeline_mode<synchronous>, transform_indices = @transform_1, window_bounds = array<i64: 36, 8>}, {pipeline_mode = #tpu.pipeline_mode<synchronous>, transform_indices = @transform_2, window_bounds = array<i64: 1, 8>}, {transform_indices = @transform_3, window_bounds = array<i64: 1, 1, 128, 8>}, {transform_indices = @transform_4, window_bounds = array<i64: 1, 1, 2, 8>}]} {
    %c0 = arith.constant 0 : index
    %c0_0 = arith.constant 0 : index
    %c0_1 = arith.constant 0 : index
    %c0_2 = arith.constant 0 : index
    %c0_3 = arith.constant 0 : index
    %0 = vector.load %arg2[%c0, %c0_0, %c0_1, %c0_2, %c0_3] : memref<1x1x20x28x4xbf16, #tpu.memory_space<vmem>>, vector<1x1x8x16x4xbf16>
    %1 = vector.shape_cast %0 : vector<1x1x8x16x4xbf16> to vector<8x16x4xbf16>
    %c0_4 = arith.constant 0 : index
    %c0_5 = arith.constant 0 : index
    %c0_6 = arith.constant 0 : index
    %2 = vector.load %arg7[%c0_4, %c0_5, %c0_6] : memref<8x16x36xbf16, #tpu.memory_space<vmem>>, vector<8x16x4xbf16>
    tpu.vector_store %arg7[%c0_4, %c0_5, %c0_6], %1 {strides = array<i32>} : memref<8x16x36xbf16, #tpu.memory_space<vmem>>, vector<8x16x4xbf16>,
    %c0_7 = arith.constant 0 : index
    %c0_8 = arith.constant 0 : index
    %c0_9 = arith.constant 0 : index
    %c6 = arith.constant 6 : index
    %c0_10 = arith.constant 0 : index
    %3 = vector.load %arg2[%c0_7, %c0_8, %c0_9, %c6, %c0_10] : memref<1x1x20x28x4xbf16, #tpu.memory_space<vmem>>, vector<1x1x8x16x4xbf16>
    %4 = vector.shape_cast %3 : vector<1x1x8x16x4xbf16> to vector<8x16x4xbf16>
    %c0_11 = arith.constant 0 : index
    %c0_12 = arith.constant 0 : index
    %c4 = arith.constant 4 : index
    %5 = vector.load %arg7[%c0_11, %c0_12, %c4] : memref<8x16x36xbf16, #tpu.memory_space<vmem>>, vector<8x16x4xbf16>
    tpu.vector_store %arg7[%c0_11, %c0_12, %c4], %4 {strides = array<i32>} : memref<8x16x36xbf16, #tpu.memory_space<vmem>>, vector<8x16x4xbf16>,
    %c0_13 = arith.constant 0 : index
    %c0_14 = arith.constant 0 : index
    %c0_15 = arith.constant 0 : index
    %c12 = arith.constant 12 : index
    %c0_16 = arith.constant 0 : index
    %6 = vector.load %arg2[%c0_13, %c0_14, %c0_15, %c12, %c0_16] : memref<1x1x20x28x4xbf16, #tpu.memory_space<vmem>>, vector<1x1x8x16x4xbf16>
    %7 = vector.shape_cast %6 : vector<1x1x8x16x4xbf16> to vector<8x16x4xbf16>
    %c0_17 = arith.constant 0 : index
    %c0_18 = arith.constant 0 : index
    %c8 = arith.constant 8 : index
    %8 = vector.load %arg7[%c0_17, %c0_18, %c8] : memref<8x16x36xbf16, #tpu.memory_space<vmem>>, vector<8x16x4xbf16>
    tpu.vector_store %arg7[%c0_17, %c0_18, %c8], %7 {strides = array<i32>} : memref<8x16x36xbf16, #tpu.memory_space<vmem>>, vector<8x16x4xbf16>,
    %c0_19 = arith.constant 0 : index
    %c0_20 = arith.constant 0 : index
    %c6_21 = arith.constant 6 : index
    %c0_22 = arith.constant 0 : index
    %c0_23 = arith.constant 0 : index
    %9 = vector.load %arg2[%c0_19, %c0_20, %c6_21, %c0_22, %c0_23] : memref<1x1x20x28x4xbf16, #tpu.memory_space<vmem>>, vector<1x1x8x16x4xbf16>
    %10 = vector.shape_cast %9 : vector<1x1x8x16x4xbf16> to vector<8x16x4xbf16>
    %c0_24 = arith.constant 0 : index
    %c0_25 = arith.constant 0 : index
    %c12_26 = arith.constant 12 : index
    %11 = vector.load %arg7[%c0_24, %c0_25, %c12_26] : memref<8x16x36xbf16, #tpu.memory_space<vmem>>, vector<8x16x4xbf16>
    tpu.vector_store %arg7[%c0_24, %c0_25, %c12_26], %10 {strides = array<i32>} : memref<8x16x36xbf16, #tpu.memory_space<vmem>>, vector<8x16x4xbf16>,
    %c0_27 = arith.constant 0 : index
    %c0_28 = arith.constant 0 : index
    %c6_29 = arith.constant 6 : index
    %c6_30 = arith.constant 6 : index
    %c0_31 = arith.constant 0 : index
    %12 = vector.load %arg2[%c0_27, %c0_28, %c6_29, %c6_30, %c0_31] : memref<1x1x20x28x4xbf16, #tpu.memory_space<vmem>>, vector<1x1x8x16x4xbf16>
    %13 = vector.shape_cast %12 : vector<1x1x8x16x4xbf16> to vector<8x16x4xbf16>
    %c0_32 = arith.constant 0 : index
    %c0_33 = arith.constant 0 : index
    %c16 = arith.constant 16 : index
    %14 = vector.load %arg7[%c0_32, %c0_33, %c16] : memref<8x16x36xbf16, #tpu.memory_space<vmem>>, vector<8x16x4xbf16>
    tpu.vector_store %arg7[%c0_32, %c0_33, %c16], %13 {strides = array<i32>} : memref<8x16x36xbf16, #tpu.memory_space<vmem>>, vector<8x16x4xbf16>,
    %c0_34 = arith.constant 0 : index
    %c0_35 = arith.constant 0 : index
    %c6_36 = arith.constant 6 : index
    %c12_37 = arith.constant 12 : index
    %c0_38 = arith.constant 0 : index
    %15 = vector.load %arg2[%c0_34, %c0_35, %c6_36, %c12_37, %c0_38] : memref<1x1x20x28x4xbf16, #tpu.memory_space<vmem>>, vector<1x1x8x16x4xbf16>
    %16 = vector.shape_cast %15 : vector<1x1x8x16x4xbf16> to vector<8x16x4xbf16>
    %c0_39 = arith.constant 0 : index
    %c0_40 = arith.constant 0 : index
    %c20 = arith.constant 20 : index
    %17 = vector.load %arg7[%c0_39, %c0_40, %c20] : memref<8x16x36xbf16, #tpu.memory_space<vmem>>, vector<8x16x4xbf16>
    tpu.vector_store %arg7[%c0_39, %c0_40, %c20], %16 {strides = array<i32>} : memref<8x16x36xbf16, #tpu.memory_space<vmem>>, vector<8x16x4xbf16>,
    %c0_41 = arith.constant 0 : index
    %c0_42 = arith.constant 0 : index
    %c12_43 = arith.constant 12 : index
    %c0_44 = arith.constant 0 : index
    %c0_45 = arith.constant 0 : index
    %18 = vector.load %arg2[%c0_41, %c0_42, %c12_43, %c0_44, %c0_45] : memref<1x1x20x28x4xbf16, #tpu.memory_space<vmem>>, vector<1x1x8x16x4xbf16>
    %19 = vector.shape_cast %18 : vector<1x1x8x16x4xbf16> to vector<8x16x4xbf16>
    %c0_46 = arith.constant 0 : index
    %c0_47 = arith.constant 0 : index
    %c24 = arith.constant 24 : index
    %20 = vector.load %arg7[%c0_46, %c0_47, %c24] : memref<8x16x36xbf16, #tpu.memory_space<vmem>>, vector<8x16x4xbf16>
    tpu.vector_store %arg7[%c0_46, %c0_47, %c24], %19 {strides = array<i32>} : memref<8x16x36xbf16, #tpu.memory_space<vmem>>, vector<8x16x4xbf16>,
    %c0_48 = arith.constant 0 : index
    %c0_49 = arith.constant 0 : index
    %c12_50 = arith.constant 12 : index
    %c6_51 = arith.constant 6 : index
    %c0_52 = arith.constant 0 : index
    %21 = vector.load %arg2[%c0_48, %c0_49, %c12_50, %c6_51, %c0_52] : memref<1x1x20x28x4xbf16, #tpu.memory_space<vmem>>, vector<1x1x8x16x4xbf16>
    %22 = vector.shape_cast %21 : vector<1x1x8x16x4xbf16> to vector<8x16x4xbf16>
    %c0_53 = arith.constant 0 : index
    %c0_54 = arith.constant 0 : index
    %c28 = arith.constant 28 : index
    %23 = vector.load %arg7[%c0_53, %c0_54, %c28] : memref<8x16x36xbf16, #tpu.memory_space<vmem>>, vector<8x16x4xbf16>
    tpu.vector_store %arg7[%c0_53, %c0_54, %c28], %22 {strides = array<i32>} : memref<8x16x36xbf16, #tpu.memory_space<vmem>>, vector<8x16x4xbf16>,
    %c0_55 = arith.constant 0 : index
    %c0_56 = arith.constant 0 : index
    %c12_57 = arith.constant 12 : index
    %c12_58 = arith.constant 12 : index
    %c0_59 = arith.constant 0 : index
    %24 = vector.load %arg2[%c0_55, %c0_56, %c12_57, %c12_58, %c0_59] : memref<1x1x20x28x4xbf16, #tpu.memory_space<vmem>>, vector<1x1x8x16x4xbf16>
    %25 = vector.shape_cast %24 : vector<1x1x8x16x4xbf16> to vector<8x16x4xbf16>
    %c0_60 = arith.constant 0 : index
    %c0_61 = arith.constant 0 : index
    %c32 = arith.constant 32 : index
    %26 = vector.load %arg7[%c0_60, %c0_61, %c32] : memref<8x16x36xbf16, #tpu.memory_space<vmem>>, vector<8x16x4xbf16>
    tpu.vector_store %arg7[%c0_60, %c0_61, %c32], %25 {strides = array<i32>} : memref<8x16x36xbf16, #tpu.memory_space<vmem>>, vector<8x16x4xbf16>,
    %c0_62 = arith.constant 0 : index
    %c0_63 = arith.constant 0 : index
    %c0_64 = arith.constant 0 : index
    %27 = vector.load %arg7[%c0_62, %c0_63, %c0_64] : memref<8x16x36xbf16, #tpu.memory_space<vmem>>, vector<8x16x36xbf16>
    %28 = vector.shape_cast %27 : vector<8x16x36xbf16> to vector<128x36xbf16>
    %c0_65 = arith.constant 0 : index
    %c0_66 = arith.constant 0 : index
    %29 = vector.load %arg3[%c0_65, %c0_66] : memref<36x8xbf16, #tpu.memory_space<vmem>>, vector<36x8xbf16>
    %cst = arith.constant dense<0.000000e+00> : vector<128x8xf32>
    %30 = tpu.matmul %28, %29, %cst {dimension_numbers = #tpu.dot_dimension_numbers<[1], [0], [0], [1], [0, 0, 1, 1], [], []>} : vector<128x36xbf16>, vector<36x8xbf16>, vector<128x8xf32> -> vector<128x8xf32>
    %c0_67 = arith.constant 0 : index
    %c0_68 = arith.constant 0 : index
    %31 = vector.load %arg4[%c0_67, %c0_68] : memref<1x8xf32, #tpu.memory_space<vmem>>, vector<1x8xf32>
    %32 = vector.broadcast %31 : vector<1x8xf32> to vector<128x8xf32>
    %33 = arith.addf %30, %32 : vector<128x8xf32>
    %c0_69 = arith.constant 0 : index
    %c0_70 = arith.constant 0 : index
    %c0_71 = arith.constant 0 : index
    %c0_72 = arith.constant 0 : index
    %34 = vector.load %arg5[%c0_69, %c0_70, %c0_71, %c0_72] : memref<1x1x128x8xf32, #tpu.memory_space<vmem>>, vector<1x1x128x8xf32>
    %35 = vector.shape_cast %34 : vector<1x1x128x8xf32> to vector<128x8xf32>
    %36 = vector.shape_cast %33 : vector<128x8xf32> to vector<1x1x128x8xf32>
    tpu.vector_store %arg5[%c0_69, %c0_70, %c0_71, %c0_72], %36 {strides = array<i32>} : memref<1x1x128x8xf32, #tpu.memory_space<vmem>>, vector<1x1x128x8xf32>,
    %cst_73 = arith.constant dense<0.000000e+00> : vector<8xf32>
    %37 = vector.multi_reduction <add>, %33, %cst_73 [0] : vector<128x8xf32> to vector<8xf32>
    %38 = vector.shape_cast %37 : vector<8xf32> to vector<1x8xf32>
    %c0_74 = arith.constant 0 : index
    %c0_75 = arith.constant 0 : index
    %c0_76 = arith.constant 0 : index
    %c0_77 = arith.constant 0 : index
    %39 = vector.load %arg6[%c0_74, %c0_75, %c0_76, %c0_77] : memref<1x1x2x8xf32, #tpu.memory_space<vmem>>, vector<1x1x1x8xf32>
    %40 = vector.shape_cast %39 : vector<1x1x1x8xf32> to vector<1x8xf32>
    %41 = vector.shape_cast %38 : vector<1x8xf32> to vector<1x1x1x8xf32>
    tpu.vector_store %arg6[%c0_74, %c0_75, %c0_76, %c0_77], %41 {strides = array<i32>} : memref<1x1x2x8xf32, #tpu.memory_space<vmem>>, vector<1x1x1x8xf32>,
    %42 = arith.mulf %33, %33 : vector<128x8xf32>
    %cst_78 = arith.constant dense<0.000000e+00> : vector<8xf32>
    %43 = vector.multi_reduction <add>, %42, %cst_78 [0] : vector<128x8xf32> to vector<8xf32>
    %44 = vector.shape_cast %43 : vector<8xf32> to vector<1x8xf32>
    %c0_79 = arith.constant 0 : index
    %c0_80 = arith.constant 0 : index
    %c1 = arith.constant 1 : index
    %c0_81 = arith.constant 0 : index
    %45 = vector.load %arg6[%c0_79, %c0_80, %c1, %c0_81] : memref<1x1x2x8xf32, #tpu.memory_space<vmem>>, vector<1x1x1x8xf32>
    %46 = vector.shape_cast %45 : vector<1x1x1x8xf32> to vector<1x8xf32>
    %47 = vector.shape_cast %44 : vector<1x8xf32> to vector<1x1x1x8xf32>
    tpu.vector_store %arg6[%c0_79, %c0_80, %c1, %c0_81], %47 {strides = array<i32>} : memref<1x1x2x8xf32, #tpu.memory_space<vmem>>, vector<1x1x1x8xf32>,
    return
  }
  func.func @transform_0(%arg0: i32, %arg1: i32) -> (i32, i32, i32, i32, i32) {
    %c0_i32 = arith.constant 0 : i32
    %c0_i32_0 = arith.constant 0 : i32
    %c0_i32_1 = arith.constant 0 : i32
    %c0_i32_2 = arith.constant 0 : i32
    return %arg0, %arg1, %c0_i32, %c0_i32_0, %c0_i32_1 : i32, i32, i32, i32, i32
  }
  func.func @transform_1(%arg0: i32, %arg1: i32) -> (i32, i32) {
    %c0_i32 = arith.constant 0 : i32
    %c0_i32_0 = arith.constant 0 : i32
    %c0_i32_1 = arith.constant 0 : i32
    return %c0_i32, %c0_i32_0 : i32, i32
  }
  func.func @transform_2(%arg0: i32, %arg1: i32) -> (i32, i32) {
    %c0_i32 = arith.constant 0 : i32
    %c0_i32_0 = arith.constant 0 : i32
    %c0_i32_1 = arith.constant 0 : i32
    return %c0_i32, %c0_i32_0 : i32, i32
  }
  func.func @transform_3(%arg0: i32, %arg1: i32) -> (i32, i32, i32, i32) {
    %c0_i32 = arith.constant 0 : i32
    %c0_i32_0 = arith.constant 0 : i32
    %c0_i32_1 = arith.constant 0 : i32
    return %arg0, %arg1, %c0_i32, %c0_i32_0 : i32, i32, i32, i32
  }
  func.func @transform_4(%arg0: i32, %arg1: i32) -> (i32, i32, i32, i32) {
    %c0_i32 = arith.constant 0 : i32
    %c0_i32_0 = arith.constant 0 : i32
    %c0_i32_1 = arith.constant 0 : i32
    return %arg0, %arg1, %c0_i32, %c0_i32_0 : i32, i32, i32, i32
  }
}

module attributes {stable_mosaic.version = 11 : i64} {
  func.func @_bn_apply_kernel(%arg0: i32, %arg1: i32, %arg2: memref<1x1x128x8xf32, #tpu.memory_space<vmem>>, %arg3: memref<1x16xf32, #tpu.memory_space<vmem>>, %arg4: memref<1x16xf32, #tpu.memory_space<vmem>>, %arg5: memref<1x1x128x16xf32, #tpu.memory_space<vmem>>) attributes {dimension_semantics = [#tpu.dimension_semantics<parallel>, #tpu.dimension_semantics<parallel>], iteration_bounds = array<i64: 2, 2>, scalar_prefetch = 0 : i64, scratch_operands = 0 : i64, tpu.core_type = #tpu.core_type<tc>, window_params = [{transform_indices = @transform_0, window_bounds = array<i64: 1, 1, 128, 8>}, {pipeline_mode = #tpu.pipeline_mode<synchronous>, transform_indices = @transform_1, window_bounds = array<i64: 1, 16>}, {pipeline_mode = #tpu.pipeline_mode<synchronous>, transform_indices = @transform_2, window_bounds = array<i64: 1, 16>}, {transform_indices = @transform_3, window_bounds = array<i64: 1, 1, 128, 16>}]} {
    %c0 = arith.constant 0 : index
    %c0_0 = arith.constant 0 : index
    %c0_1 = arith.constant 0 : index
    %c0_2 = arith.constant 0 : index
    %0 = vector.load %arg2[%c0, %c0_0, %c0_1, %c0_2] : memref<1x1x128x8xf32, #tpu.memory_space<vmem>>, vector<1x1x128x8xf32>
    %1 = vector.shape_cast %0 : vector<1x1x128x8xf32> to vector<128x8xf32>
    %c0_3 = arith.constant 0 : index
    %c0_4 = arith.constant 0 : index
    %2 = vector.load %arg3[%c0_3, %c0_4] : memref<1x16xf32, #tpu.memory_space<vmem>>, vector<1x16xf32>
    %c0_5 = arith.constant 0 : index
    %c0_6 = arith.constant 0 : index
    %3 = vector.load %arg4[%c0_5, %c0_6] : memref<1x16xf32, #tpu.memory_space<vmem>>, vector<1x16xf32>
    %4 = vector.extract_strided_slice %2 {offsets = [0, 0], sizes = [1, 8], strides = [1, 1]} : vector<1x16xf32> to vector<1x8xf32>
    %5 = vector.broadcast %4 : vector<1x8xf32> to vector<128x8xf32>
    %6 = arith.mulf %1, %5 : vector<128x8xf32>
    %7 = vector.extract_strided_slice %3 {offsets = [0, 0], sizes = [1, 8], strides = [1, 1]} : vector<1x16xf32> to vector<1x8xf32>
    %8 = vector.broadcast %7 : vector<1x8xf32> to vector<128x8xf32>
    %9 = arith.addf %6, %8 : vector<128x8xf32>
    %c0_7 = arith.constant 0 : index
    %c0_8 = arith.constant 0 : index
    %c0_9 = arith.constant 0 : index
    %c0_10 = arith.constant 0 : index
    %10 = vector.load %arg5[%c0_7, %c0_8, %c0_9, %c0_10] : memref<1x1x128x16xf32, #tpu.memory_space<vmem>>, vector<1x1x128x8xf32>
    %11 = vector.shape_cast %10 : vector<1x1x128x8xf32> to vector<128x8xf32>
    %12 = vector.shape_cast %9 : vector<128x8xf32> to vector<1x1x128x8xf32>
    tpu.vector_store %arg5[%c0_7, %c0_8, %c0_9, %c0_10], %12 {strides = array<i32>} : memref<1x1x128x16xf32, #tpu.memory_space<vmem>>, vector<1x1x128x8xf32>,
    %13 = vector.extract_strided_slice %1 {offsets = [0, 4], sizes = [128, 4], strides = [1, 1]} : vector<128x8xf32> to vector<128x4xf32>
    %14 = vector.extract_strided_slice %2 {offsets = [0, 8], sizes = [1, 4], strides = [1, 1]} : vector<1x16xf32> to vector<1x4xf32>
    %15 = vector.broadcast %14 : vector<1x4xf32> to vector<128x4xf32>
    %16 = arith.mulf %13, %15 : vector<128x4xf32>
    %17 = vector.extract_strided_slice %3 {offsets = [0, 8], sizes = [1, 4], strides = [1, 1]} : vector<1x16xf32> to vector<1x4xf32>
    %18 = vector.broadcast %17 : vector<1x4xf32> to vector<128x4xf32>
    %19 = arith.addf %16, %18 : vector<128x4xf32>
    %c0_11 = arith.constant 0 : index
    %c0_12 = arith.constant 0 : index
    %c0_13 = arith.constant 0 : index
    %c8 = arith.constant 8 : index
    %20 = vector.load %arg5[%c0_11, %c0_12, %c0_13, %c8] : memref<1x1x128x16xf32, #tpu.memory_space<vmem>>, vector<1x1x128x4xf32>
    %21 = vector.shape_cast %20 : vector<1x1x128x4xf32> to vector<128x4xf32>
    %22 = vector.shape_cast %19 : vector<128x4xf32> to vector<1x1x128x4xf32>
    tpu.vector_store %arg5[%c0_11, %c0_12, %c0_13, %c8], %22 {strides = array<i32>} : memref<1x1x128x16xf32, #tpu.memory_space<vmem>>, vector<1x1x128x4xf32>,
    %23 = vector.extract_strided_slice %2 {offsets = [0, 12], sizes = [1, 4], strides = [1, 1]} : vector<1x16xf32> to vector<1x4xf32>
    %24 = vector.broadcast %23 : vector<1x4xf32> to vector<128x4xf32>
    %25 = arith.mulf %13, %24 : vector<128x4xf32>
    %26 = vector.extract_strided_slice %3 {offsets = [0, 12], sizes = [1, 4], strides = [1, 1]} : vector<1x16xf32> to vector<1x4xf32>
    %27 = vector.broadcast %26 : vector<1x4xf32> to vector<128x4xf32>
    %28 = arith.addf %25, %27 : vector<128x4xf32>
    %c0_14 = arith.constant 0 : index
    %c0_15 = arith.constant 0 : index
    %c0_16 = arith.constant 0 : index
    %c12 = arith.constant 12 : index
    %29 = vector.load %arg5[%c0_14, %c0_15, %c0_16, %c12] : memref<1x1x128x16xf32, #tpu.memory_space<vmem>>, vector<1x1x128x4xf32>
    %30 = vector.shape_cast %29 : vector<1x1x128x4xf32> to vector<128x4xf32>
    %31 = vector.shape_cast %28 : vector<128x4xf32> to vector<1x1x128x4xf32>
    tpu.vector_store %arg5[%c0_14, %c0_15, %c0_16, %c12], %31 {strides = array<i32>} : memref<1x1x128x16xf32, #tpu.memory_space<vmem>>, vector<1x1x128x4xf32>,
    return
  }
  func.func @transform_0(%arg0: i32, %arg1: i32) -> (i32, i32, i32, i32) {
    %c0_i32 = arith.constant 0 : i32
    %c0_i32_0 = arith.constant 0 : i32
    %c0_i32_1 = arith.constant 0 : i32
    return %arg0, %arg1, %c0_i32, %c0_i32_0 : i32, i32, i32, i32
  }
  func.func @transform_1(%arg0: i32, %arg1: i32) -> (i32, i32) {
    %c0_i32 = arith.constant 0 : i32
    %c0_i32_0 = arith.constant 0 : i32
    %c0_i32_1 = arith.constant 0 : i32
    return %c0_i32, %c0_i32_0 : i32, i32
  }
  func.func @transform_2(%arg0: i32, %arg1: i32) -> (i32, i32) {
    %c0_i32 = arith.constant 0 : i32
    %c0_i32_0 = arith.constant 0 : i32
    %c0_i32_1 = arith.constant 0 : i32
    return %c0_i32, %c0_i32_0 : i32, i32
  }
  func.func @transform_3(%arg0: i32, %arg1: i32) -> (i32, i32, i32, i32) {
    %c0_i32 = arith.constant 0 : i32
    %c0_i32_0 = arith.constant 0 : i32
    %c0_i32_1 = arith.constant 0 : i32
    return %arg0, %arg1, %c0_i32, %c0_i32_0 : i32, i32, i32, i32
  }
}

</mosaic_0001>

<llo_original>
// kernel: pyramid_dilation_conv.3
$region0: #{pyramid_dilation_conv.3}
  #allocation0 [shape = 'u32[]', space=smem, size = 0x4, offset = 0x4, fixed_abs, tag = 'smem constant byte address 0x4 - core index']
  #allocation1 [shape = 'u32[144,128]{1,0:T(1,128)}', space=vmem, size = 0x12000, scoped, tag = 'internal scratch']
  %s0 = inlined_call_operand.vmem [shape: f32[2,2,128,8], index: 0, kind: input, shape index: {}]
  %s1 = inlined_call_operand.vmem [shape: f32[1,16], index: 1, kind: input, shape index: {}]
  %s2 = inlined_call_operand.vmem [shape: f32[1,16], index: 2, kind: input, shape index: {}]
  %s3 = inlined_call_operand.vmem [shape: f32[2,2,128,16], index: 3, kind: output, shape index: {}]
  %s4 = sld [smem:[#allocation0]]
  $region45: #{pyramid_dilation_conv.3} parent=0
    _
  %s6 = ssub.s32 1, %s4
  %s7 = scalar_select 0, %s6, %s4
  loop: start=0, step=1, limit=6
  $region2: #{pyramid_dilation_conv.3} parent=0 // loop_pre_header
    _
  $region3: #{pyramid_dilation_conv.3} parent=0 // loop_header
    %s9 = sphi 0, %s13
    %p10 = scmp.ge.s32.totalorder %s9, 6
    %s16 = sphi 0, %s28
    %s17 = sphi 0, %s24
    %s18 = sphi 0, %s16
    %s19 = sphi 0, %s17
    %s20 = sphi 0, %s18
    %s21 = sphi 0, %s19
    %s33 = sphi 0, %s35
    %s36 = sphi 0, %s33
    %s37 = sphi 0, %s36
    %s53 = sphi 0, %s37
    %s57 = sphi 0, %s57
    %s59 = sphi 0, %s57
    %s60 = sphi 0, %s59
    %s74 = sphi 0, %s60
    %s78 = sphi 0, %s78
    %s80 = sphi 0, %s78
    %s81 = sphi 0, %s80
    %s95 = sphi 0, %s81
    %s103 = sphi 0, %s105
    %s106 = sphi 0, %s103
    %s107 = sphi 0, %s106
    %s123 = sphi 0, %s107
  $region4: #{pyramid_dilation_conv.3} parent=0 // loop_header_branch
    %12 = sbr.rel (%p10) target = $region8
  $region5: #{pyramid_dilation_conv.3} parent=0 // loop_body
    %s14 = ssub.s32 %s9, 1
    %s15 = ssub.s32 %s9, 2
    %s22 = sadd.s32 1, %s17
    %p23 = scmp.ge.s32.totalorder %s22, 2
    %s24 = scalar_select %p23, 0, %s22
    %s25 = sadd.s32 1, %s16
    %s26 = scalar_select %p23, %s25, %s16
    %p27 = scmp.ge.s32.totalorder %s26, 2
    %s28 = scalar_select %p27, 0, %s26
    %s29 = ssub.s32 %s16, %s28
    %s30 = ssub.s32 %s17, %s24
    %s31 = sor.u32 %s29, %s30
    %p32 = scmp.eq.s32.totalorder %s31, 0
    %s34 = sadd.s32 %s33, 1
    %s35 = scalar_select %p32, %s33, %s34
    %p38 = pneg %p32
    %p39 = scmp.eq.s32.totalorder %s9, 3
    %p40 = por %p38, %p39
    %p41 = scmp.ne.s32.totalorder %s33, %s36
    %p42 = scmp.eq.s32.totalorder %s9, 0
    %p43 = por %p41, %p42
    %p44 = scmp.ne.s32.totalorder %s33, %s36
    %p45 = scmp.eq.s32.totalorder %s14, 3
    %p46 = por %p44, %p45
    %p47 = scmp.ne.s32.totalorder %s36, %s37
    %p48 = scmp.eq.s32.totalorder %s14, 0
    %p49 = por %p47, %p48
    %p50 = scmp.ne.s32.totalorder %s36, %s37
    %p51 = scmp.eq.s32.totalorder %s15, 3
    %p52 = por %p50, %p51
    %p54 = scmp.ne.s32.totalorder %s37, %s53
    %p55 = scmp.eq.s32.totalorder %s15, 0
    %p56 = por %p54, %p55
    %s58 = sadd.s32 %s57, 1
    %p61 = scmp.eq.s32.totalorder %s9, 3
    %p62 = scmp.ne.s32.totalorder %s57, %s59
    %p63 = scmp.eq.s32.totalorder %s9, 0
    %p64 = por %p62, %p63
    %p65 = scmp.ne.s32.totalorder %s57, %s59
    %p66 = scmp.eq.s32.totalorder %s14, 3
    %p67 = por %p65, %p66
    %p68 = scmp.ne.s32.totalorder %s59, %s60
    %p69 = scmp.eq.s32.totalorder %s14, 0
    %p70 = por %p68, %p69
    %p71 = scmp.ne.s32.totalorder %s59, %s60
    %p72 = scmp.eq.s32.totalorder %s15, 3
    %p73 = por %p71, %p72
    %p75 = scmp.ne.s32.totalorder %s60, %s74
    %p76 = scmp.eq.s32.totalorder %s15, 0
    %p77 = por %p75, %p76
    %s79 = sadd.s32 %s78, 1
    %p82 = scmp.eq.s32.totalorder %s9, 3
    %p83 = scmp.ne.s32.totalorder %s78, %s80
    %p84 = scmp.eq.s32.totalorder %s9, 0
    %p85 = por %p83, %p84
    %p86 = scmp.ne.s32.totalorder %s78, %s80
    %p87 = scmp.eq.s32.totalorder %s14, 3
    %p88 = por %p86, %p87
    %p89 = scmp.ne.s32.totalorder %s80, %s81
    %p90 = scmp.eq.s32.totalorder %s14, 0
    %p91 = por %p89, %p90
    %p92 = scmp.ne.s32.totalorder %s80, %s81
    %p93 = scmp.eq.s32.totalorder %s15, 3
    %p94 = por %p92, %p93
    %p96 = scmp.ne.s32.totalorder %s81, %s95
    %p97 = scmp.eq.s32.totalorder %s15, 0
    %p98 = por %p96, %p97
    %s99 = ssub.s32 %s16, %s28
    %s100 = ssub.s32 %s17, %s24
    %s101 = sor.u32 %s99, %s100
    %p102 = scmp.eq.s32.totalorder %s101, 0
    %s104 = sadd.s32 %s103, 1
    %s105 = scalar_select %p102, %s103, %s104
    %p108 = pneg %p102
    %p109 = scmp.eq.s32.totalorder %s9, 3
    %p110 = por %p108, %p109
    %p111 = scmp.ne.s32.totalorder %s103, %s106
    %p112 = scmp.eq.s32.totalorder %s9, 0
    %p113 = por %p111, %p112
    %p114 = scmp.ne.s32.totalorder %s103, %s106
    %p115 = scmp.eq.s32.totalorder %s14, 3
    %p116 = por %p114, %p115
    %p117 = scmp.ne.s32.totalorder %s106, %s107
    %p118 = scmp.eq.s32.totalorder %s14, 0
    %p119 = por %p117, %p118
    %p120 = scmp.ne.s32.totalorder %s106, %s107
    %p121 = scmp.eq.s32.totalorder %s15, 3
    %p122 = por %p120, %p121
    %p124 = scmp.ne.s32.totalorder %s107, %s123
    %p125 = scmp.eq.s32.totalorder %s15, 0
    %p126 = por %p124, %p125
    %p127 = scmp.le.s32.totalorder 1, %s9
    %p128 = scmp.lt.s32.totalorder %s9, 5
    %p129 = pnand %p127, %p128
    %p130 = pneg %p129
    // Predicated region
    $region9: #{pyramid_dilation_conv.3} parent=5 // pred_check
      _
    $region10: #{pyramid_dilation_conv.3} parent=5 // pred_check_branch
      %132 = sbr.rel (%p129) target = $region12
    $region11: #{pyramid_dilation_conv.3} parent=5 // pred_region
      %s133 = ssub.s32 %s9, 1
      // Predicated region
      $region13: #{pyramid_dilation_conv.3} parent=11 // pred_check
        %p134 = pneg %p70
      $region14: #{pyramid_dilation_conv.3} parent=11 // pred_check_branch
        %136 = sbr.rel (%p134) target = $region16
      $region15: #{pyramid_dilation_conv.3} parent=11 // pred_region
        _
      $region16: #{pyramid_dilation_conv.3} parent=11 // pred_fallthru
        _
      // Predicated region
      $region17: #{pyramid_dilation_conv.3} parent=11 // pred_check
        %p137 = pneg %p91
      $region18: #{pyramid_dilation_conv.3} parent=11 // pred_check_branch
        %139 = sbr.rel (%p137) target = $region20
      $region19: #{pyramid_dilation_conv.3} parent=11 // pred_region
        _
      $region20: #{pyramid_dilation_conv.3} parent=11 // pred_fallthru
        _
    $region12: #{pyramid_dilation_conv.3} parent=5 // pred_fallthru
      _
    %p140 = scmp.lt.s32.totalorder %s9, 4
    // Predicated region
    $region21: #{pyramid_dilation_conv.3} parent=5 // pred_check
      %p141 = pneg %p140
    $region22: #{pyramid_dilation_conv.3} parent=5 // pred_check_branch
      %143 = sbr.rel (%p141) target = $region24
    $region23: #{pyramid_dilation_conv.3} parent=5 // pred_region
      // Predicated region
      $region25: #{pyramid_dilation_conv.3} parent=23 // pred_check
        %p144 = pneg %p43
      $region26: #{pyramid_dilation_conv.3} parent=23 // pred_check_branch
        %146 = sbr.rel (%p144) target = $region28
      $region27: #{pyramid_dilation_conv.3} parent=23 // pred_region
        %p147 = scmp.lt.s32.totalorder %s16, 1
        %s148 = scalar_select %p147, %s16, 1
        %p149 = scmp.lt.s32.totalorder %s17, 1
        %s150 = scalar_select %p149, %s17, 1
        %s151 = smul.addr %s150, 16
        %s152 = smul.addr %s148, 32
        %s153 = sadd.s32 %s151, %s152
        %s154 = smul.addr %s153, 8
        %s155 = scalar_lea.vmem %s0, %s154
      $region28: #{pyramid_dilation_conv.3} parent=23 // pred_fallthru
        _
    $region24: #{pyramid_dilation_conv.3} parent=5 // pred_fallthru
      _
    %p156 = scmp.le.s32.totalorder 1, %s9
    %p157 = scmp.lt.s32.totalorder %s9, 5
    %p158 = pnand %p156, %p157
    %p159 = pneg %p158
    // Predicated region
    $region29: #{pyramid_dilation_conv.3} parent=5 // pred_check
      _
    $region30: #{pyramid_dilation_conv.3} parent=5 // pred_check_branch
      %161 = sbr.rel (%p158) target = $region32
    $region31: #{pyramid_dilation_conv.3} parent=5 // pred_region
      %s162 = ssub.s32 %s9, 1
      %p163 = scmp.lt.s32.totalorder %s18, 1
      %s164 = scalar_select %p163, %s18, 1
      %p165 = scmp.lt.s32.totalorder %s19, 1
      %s166 = scalar_select %p165, %s19, 1
      %s167 = smul.addr %s166, 16
      %s168 = smul.addr %s164, 32
      %s169 = sadd.s32 %s167, %s168
      %s170 = smul.addr %s169, 8
      %s171 = scalar_lea.vmem %s0, %s170
      %p172 = pneg %p49
      %p173 = pneg %p46
      %p174 = pneg %p70
      %p175 = pneg %p67
      %p176 = pneg %p91
      %p177 = pneg %p88
      %p178 = pneg %p119
      %p179 = pneg %p116
      %p180 = scmp.lt.s32.totalorder %s18, 1
      %s181 = scalar_select %p180, %s18, 1
      %p182 = scmp.lt.s32.totalorder %s19, 1
      %s183 = scalar_select %p182, %s19, 1
      %s184 = smul.addr %s183, 16
      %s185 = smul.addr %s181, 32
      %s186 = sadd.s32 %s184, %s185
      %s187 = smul.addr %s186, 8
      %s188 = scalar_lea.vmem %s3, %s187
      %p189 = scmp.lt.s32.totalorder %s18, 1
      %s190 = scalar_select %p189, %s18, 1
      %p191 = scmp.lt.s32.totalorder %s19, 1
      %s192 = scalar_select %p191, %s19, 1
      %s193 = smul.addr %s192, 16
      %s194 = smul.addr %s190, 32
      %s195 = sadd.s32 %s193, %s194
      %s196 = smul.addr %s195, 8
      %s197 = scalar_lea.vmem %s0, %s196
      %p198 = scmp.lt.s32.totalorder %s18, 1
      %s199 = scalar_select %p198, %s18, 1
      %p200 = scmp.lt.s32.totalorder %s19, 1
      %s201 = scalar_select %p200, %s19, 1
      %s202 = smul.addr %s201, 16
      %s203 = smul.addr %s199, 32
      %s204 = sadd.s32 %s202, %s203
      %s205 = smul.addr %s204, 8
      %s206 = scalar_lea.vmem %s3, %s205
      %v207 = vld [vmem:[%s197] sm:$0xff]
      %v208 = vld [vmem:[%s197 + $0x8] sm:$0xff]
      %v209 = vld [vmem:[%s197 + $0x10] sm:$0xff]
      %v210 = vld [vmem:[%s197 + $0x18] sm:$0xff]
      %v211 = vld [vmem:[%s197 + $0x20] sm:$0xff]
      %v212 = vld [vmem:[%s197 + $0x28] sm:$0xff]
      %v213 = vld [vmem:[%s197 + $0x30] sm:$0xff]
      %v214 = vld [vmem:[%s197 + $0x38] sm:$0xff]
      %v215 = vld [vmem:[%s197 + $0x40] sm:$0xff]
      %v216 = vld [vmem:[%s197 + $0x48] sm:$0xff]
      %v217 = vld [vmem:[%s197 + $0x50] sm:$0xff]
      %v218 = vld [vmem:[%s197 + $0x58] sm:$0xff]
      %v219 = vld [vmem:[%s197 + $0x60] sm:$0xff]
      %v220 = vld [vmem:[%s197 + $0x68] sm:$0xff]
      %v221 = vld [vmem:[%s197 + $0x70] sm:$0xff]
      %v222 = vld [vmem:[%s197 + $0x78] sm:$0xff]
      %v223 = vld [vmem:[%s1] sm:$0x1]
      %v224 = vld [vmem:[%s2] sm:$0x1]
      %v226 = vlaneseq
      %v227 = vshrl.u32 %v226, 7
      %v228 = vsub.s32 0, %v227
      %v229 = vrot.slane %v223, %v228
      %v231 = vmul.f32 %v207, %v229
      %v232 = vmul.f32 %v208, %v229
      %v233 = vmul.f32 %v209, %v229
      %v234 = vmul.f32 %v210, %v229
      %v235 = vmul.f32 %v211, %v229
      %v236 = vmul.f32 %v212, %v229
      %v237 = vmul.f32 %v213, %v229
      %v238 = vmul.f32 %v214, %v229
      %v239 = vmul.f32 %v215, %v229
      %v240 = vmul.f32 %v216, %v229
      %v241 = vmul.f32 %v217, %v229
      %v242 = vmul.f32 %v218, %v229
      %v243 = vmul.f32 %v219, %v229
      %v244 = vmul.f32 %v220, %v229
      %v245 = vmul.f32 %v221, %v229
      %v246 = vmul.f32 %v222, %v229
      %v248 = vlaneseq
      %v249 = vshrl.u32 %v248, 7
      %v250 = vsub.s32 0, %v249
      %v251 = vrot.slane %v224, %v250
      %v253 = vadd.f32 %v231, %v251
      %v254 = vadd.f32 %v232, %v251
      %v255 = vadd.f32 %v233, %v251
      %v256 = vadd.f32 %v234, %v251
      %v257 = vadd.f32 %v235, %v251
      %v258 = vadd.f32 %v236, %v251
      %v259 = vadd.f32 %v237, %v251
      %v260 = vadd.f32 %v238, %v251
      %v261 = vadd.f32 %v239, %v251
      %v262 = vadd.f32 %v240, %v251
      %v263 = vadd.f32 %v241, %v251
      %v264 = vadd.f32 %v242, %v251
      %v265 = vadd.f32 %v243, %v251
      %v266 = vadd.f32 %v244, %v251
      %v267 = vadd.f32 %v245, %v251
      %v268 = vadd.f32 %v246, %v251
      %vm269 = vcmask 64512
      %270 = vst.msk [vmem:[%s206] sm:$0xff] %vm269, %v253
      %271 = vst.msk [vmem:[%s206 + $0x8] sm:$0xff] %vm269, %v254
      %272 = vst.msk [vmem:[%s206 + $0x10] sm:$0xff] %vm269, %v255
      %273 = vst.msk [vmem:[%s206 + $0x18] sm:$0xff] %vm269, %v256
      %274 = vst.msk [vmem:[%s206 + $0x20] sm:$0xff] %vm269, %v257
      %275 = vst.msk [vmem:[%s206 + $0x28] sm:$0xff] %vm269, %v258
      %276 = vst.msk [vmem:[%s206 + $0x30] sm:$0xff] %vm269, %v259
      %277 = vst.msk [vmem:[%s206 + $0x38] sm:$0xff] %vm269, %v260
      %278 = vst.msk [vmem:[%s206 + $0x40] sm:$0xff] %vm269, %v261
      %279 = vst.msk [vmem:[%s206 + $0x48] sm:$0xff] %vm269, %v262
      %280 = vst.msk [vmem:[%s206 + $0x50] sm:$0xff] %vm269, %v263
      %281 = vst.msk [vmem:[%s206 + $0x58] sm:$0xff] %vm269, %v264
      %282 = vst.msk [vmem:[%s206 + $0x60] sm:$0xff] %vm269, %v265
      %283 = vst.msk [vmem:[%s206 + $0x68] sm:$0xff] %vm269, %v266
      %284 = vst.msk [vmem:[%s206 + $0x70] sm:$0xff] %vm269, %v267
      %285 = vst.msk [vmem:[%s206 + $0x78] sm:$0xff] %vm269, %v268
      %286 = vrot.lane.b32.xlu0 %v229, 124
      %v287 = vpop.permute.xlu0 %286
      %v289 = vmul.f32 %v207, %v287
      %v290 = vmul.f32 %v208, %v287
      %v291 = vmul.f32 %v209, %v287
      %v292 = vmul.f32 %v210, %v287
      %v293 = vmul.f32 %v211, %v287
      %v294 = vmul.f32 %v212, %v287
      %v295 = vmul.f32 %v213, %v287
      %v296 = vmul.f32 %v214, %v287
      %v297 = vmul.f32 %v215, %v287
      %v298 = vmul.f32 %v216, %v287
      %v299 = vmul.f32 %v217, %v287
      %v300 = vmul.f32 %v218, %v287
      %v301 = vmul.f32 %v219, %v287
      %v302 = vmul.f32 %v220, %v287
      %v303 = vmul.f32 %v221, %v287
      %v304 = vmul.f32 %v222, %v287
      %305 = vrot.lane.b32.xlu0 %v251, 124
      %v306 = vpop.permute.xlu0 %305
      %v308 = vadd.f32 %v289, %v306
      %v309 = vadd.f32 %v290, %v306
      %v310 = vadd.f32 %v291, %v306
      %v311 = vadd.f32 %v292, %v306
      %v312 = vadd.f32 %v293, %v306
      %v313 = vadd.f32 %v294, %v306
      %v314 = vadd.f32 %v295, %v306
      %v315 = vadd.f32 %v296, %v306
      %v316 = vadd.f32 %v297, %v306
      %v317 = vadd.f32 %v298, %v306
      %v318 = vadd.f32 %v299, %v306
      %v319 = vadd.f32 %v300, %v306
      %v320 = vadd.f32 %v301, %v306
      %v321 = vadd.f32 %v302, %v306
      %v322 = vadd.f32 %v303, %v306
      %v323 = vadd.f32 %v304, %v306
      %340 = vrot.lane.b32.xlu0 %v308, 4
      %v341 = vpop.permute.xlu0 %340
      %342 = vrot.lane.b32.xlu0 %v309, 4
      %v343 = vpop.permute.xlu0 %342
      %344 = vrot.lane.b32.xlu0 %v310, 4
      %v345 = vpop.permute.xlu0 %344
      %346 = vrot.lane.b32.xlu0 %v311, 4
      %v347 = vpop.permute.xlu0 %346
      %348 = vrot.lane.b32.xlu0 %v312, 4
      %v349 = vpop.permute.xlu0 %348
      %350 = vrot.lane.b32.xlu0 %v313, 4
      %v351 = vpop.permute.xlu0 %350
      %352 = vrot.lane.b32.xlu0 %v314, 4
      %v353 = vpop.permute.xlu0 %352
      %354 = vrot.lane.b32.xlu0 %v315, 4
      %v355 = vpop.permute.xlu0 %354
      %356 = vrot.lane.b32.xlu0 %v316, 4
      %v357 = vpop.permute.xlu0 %356
      %358 = vrot.lane.b32.xlu0 %v317, 4
      %v359 = vpop.permute.xlu0 %358
      %360 = vrot.lane.b32.xlu0 %v318, 4
      %v361 = vpop.permute.xlu0 %360
      %362 = vrot.lane.b32.xlu0 %v319, 4
      %v363 = vpop.permute.xlu0 %362
      %364 = vrot.lane.b32.xlu0 %v320, 4
      %v365 = vpop.permute.xlu0 %364
      %366 = vrot.lane.b32.xlu0 %v321, 4
      %v367 = vpop.permute.xlu0 %366
      %368 = vrot.lane.b32.xlu0 %v322, 4
      %v369 = vpop.permute.xlu0 %368
      %370 = vrot.lane.b32.xlu0 %v323, 4
      %v371 = vpop.permute.xlu0 %370
      %vm388 = vcmask 97344
      %389 = vst.msk [vmem:[%s206] sm:$0xff] %vm388, %v341
      %390 = vst.msk [vmem:[%s206 + $0x8] sm:$0xff] %vm388, %v343
      %391 = vst.msk [vmem:[%s206 + $0x10] sm:$0xff] %vm388, %v345
      %392 = vst.msk [vmem:[%s206 + $0x18] sm:$0xff] %vm388, %v347
      %393 = vst.msk [vmem:[%s206 + $0x20] sm:$0xff] %vm388, %v349
      %394 = vst.msk [vmem:[%s206 + $0x28] sm:$0xff] %vm388, %v351
      %395 = vst.msk [vmem:[%s206 + $0x30] sm:$0xff] %vm388, %v353
      %396 = vst.msk [vmem:[%s206 + $0x38] sm:$0xff] %vm388, %v355
      %397 = vst.msk [vmem:[%s206 + $0x40] sm:$0xff] %vm388, %v357
      %398 = vst.msk [vmem:[%s206 + $0x48] sm:$0xff] %vm388, %v359
      %399 = vst.msk [vmem:[%s206 + $0x50] sm:$0xff] %vm388, %v361
      %400 = vst.msk [vmem:[%s206 + $0x58] sm:$0xff] %vm388, %v363
      %401 = vst.msk [vmem:[%s206 + $0x60] sm:$0xff] %vm388, %v365
      %402 = vst.msk [vmem:[%s206 + $0x68] sm:$0xff] %vm388, %v367
      %403 = vst.msk [vmem:[%s206 + $0x70] sm:$0xff] %vm388, %v369
      %404 = vst.msk [vmem:[%s206 + $0x78] sm:$0xff] %vm388, %v371
      %405 = vrot.lane.b32.xlu0 %v229, 120
      %v406 = vpop.permute.xlu0 %405
      %v408 = vmul.f32 %v207, %v406
      %v409 = vmul.f32 %v208, %v406
      %v410 = vmul.f32 %v209, %v406
      %v411 = vmul.f32 %v210, %v406
      %v412 = vmul.f32 %v211, %v406
      %v413 = vmul.f32 %v212, %v406
      %v414 = vmul.f32 %v213, %v406
      %v415 = vmul.f32 %v214, %v406
      %v416 = vmul.f32 %v215, %v406
      %v417 = vmul.f32 %v216, %v406
      %v418 = vmul.f32 %v217, %v406
      %v419 = vmul.f32 %v218, %v406
      %v420 = vmul.f32 %v219, %v406
      %v421 = vmul.f32 %v220, %v406
      %v422 = vmul.f32 %v221, %v406
      %v423 = vmul.f32 %v222, %v406
      %424 = vrot.lane.b32.xlu0 %v251, 120
      %v425 = vpop.permute.xlu0 %424
      %v427 = vadd.f32 %v408, %v425
      %v428 = vadd.f32 %v409, %v425
      %v429 = vadd.f32 %v410, %v425
      %v430 = vadd.f32 %v411, %v425
      %v431 = vadd.f32 %v412, %v425
      %v432 = vadd.f32 %v413, %v425
      %v433 = vadd.f32 %v414, %v425
      %v434 = vadd.f32 %v415, %v425
      %v435 = vadd.f32 %v416, %v425
      %v436 = vadd.f32 %v417, %v425
      %v437 = vadd.f32 %v418, %v425
      %v438 = vadd.f32 %v419, %v425
      %v439 = vadd.f32 %v420, %v425
      %v440 = vadd.f32 %v421, %v425
      %v441 = vadd.f32 %v422, %v425
      %v442 = vadd.f32 %v423, %v425
      %459 = vrot.lane.b32.xlu0 %v427, 8
      %v460 = vpop.permute.xlu0 %459
      %461 = vrot.lane.b32.xlu0 %v428, 8
      %v462 = vpop.permute.xlu0 %461
      %463 = vrot.lane.b32.xlu0 %v429, 8
      %v464 = vpop.permute.xlu0 %463
      %465 = vrot.lane.b32.xlu0 %v430, 8
      %v466 = vpop.permute.xlu0 %465
      %467 = vrot.lane.b32.xlu0 %v431, 8
      %v468 = vpop.permute.xlu0 %467
      %469 = vrot.lane.b32.xlu0 %v432, 8
      %v470 = vpop.permute.xlu0 %469
      %471 = vrot.lane.b32.xlu0 %v433, 8
      %v472 = vpop.permute.xlu0 %471
      %473 = vrot.lane.b32.xlu0 %v434, 8
      %v474 = vpop.permute.xlu0 %473
      %475 = vrot.lane.b32.xlu0 %v435, 8
      %v476 = vpop.permute.xlu0 %475
      %477 = vrot.lane.b32.xlu0 %v436, 8
      %v478 = vpop.permute.xlu0 %477
      %479 = vrot.lane.b32.xlu0 %v437, 8
      %v480 = vpop.permute.xlu0 %479
      %481 = vrot.lane.b32.xlu0 %v438, 8
      %v482 = vpop.permute.xlu0 %481
      %483 = vrot.lane.b32.xlu0 %v439, 8
      %v484 = vpop.permute.xlu0 %483
      %485 = vrot.lane.b32.xlu0 %v440, 8
      %v486 = vpop.permute.xlu0 %485
      %487 = vrot.lane.b32.xlu0 %v441, 8
      %v488 = vpop.permute.xlu0 %487
      %489 = vrot.lane.b32.xlu0 %v442, 8
      %v490 = vpop.permute.xlu0 %489
      %vm507 = vcmask 130144
      %508 = vst.msk [vmem:[%s206] sm:$0xff] %vm507, %v460
      %509 = vst.msk [vmem:[%s206 + $0x8] sm:$0xff] %vm507, %v462
      %510 = vst.msk [vmem:[%s206 + $0x10] sm:$0xff] %vm507, %v464
      %511 = vst.msk [vmem:[%s206 + $0x18] sm:$0xff] %vm507, %v466
      %512 = vst.msk [vmem:[%s206 + $0x20] sm:$0xff] %vm507, %v468
      %513 = vst.msk [vmem:[%s206 + $0x28] sm:$0xff] %vm507, %v470
      %514 = vst.msk [vmem:[%s206 + $0x30] sm:$0xff] %vm507, %v472
      %515 = vst.msk [vmem:[%s206 + $0x38] sm:$0xff] %vm507, %v474
      %516 = vst.msk [vmem:[%s206 + $0x40] sm:$0xff] %vm507, %v476
      %517 = vst.msk [vmem:[%s206 + $0x48] sm:$0xff] %vm507, %v478
      %518 = vst.msk [vmem:[%s206 + $0x50] sm:$0xff] %vm507, %v480
      %519 = vst.msk [vmem:[%s206 + $0x58] sm:$0xff] %vm507, %v482
      %520 = vst.msk [vmem:[%s206 + $0x60] sm:$0xff] %vm507, %v484
      %521 = vst.msk [vmem:[%s206 + $0x68] sm:$0xff] %vm507, %v486
      %522 = vst.msk [vmem:[%s206 + $0x70] sm:$0xff] %vm507, %v488
      %523 = vst.msk [vmem:[%s206 + $0x78] sm:$0xff] %vm507, %v490
      %p524 = scmp.lt.s32.totalorder %s18, 1
      %s525 = scalar_select %p524, %s18, 1
      %p526 = scmp.lt.s32.totalorder %s19, 1
      %s527 = scalar_select %p526, %s19, 1
      %s528 = smul.addr %s527, 16
      %s529 = smul.addr %s525, 32
      %s530 = sadd.s32 %s528, %s529
      %s531 = smul.addr %s530, 8
      %s532 = scalar_lea.vmem %s3, %s531
      // Predicated region
      $region33: #{pyramid_dilation_conv.3} parent=31 // pred_check
        %p533 = pneg %p116
      $region34: #{pyramid_dilation_conv.3} parent=31 // pred_check_branch
        %535 = sbr.rel (%p533) target = $region36
      $region35: #{pyramid_dilation_conv.3} parent=31 // pred_region
        _
      $region36: #{pyramid_dilation_conv.3} parent=31 // pred_fallthru
        _
    $region32: #{pyramid_dilation_conv.3} parent=5 // pred_fallthru
      _
    %p536 = scmp.le.s32.totalorder 2, %s9
    // Predicated region
    $region37: #{pyramid_dilation_conv.3} parent=5 // pred_check
      %p537 = pneg %p536
    $region38: #{pyramid_dilation_conv.3} parent=5 // pred_check_branch
      %539 = sbr.rel (%p537) target = $region40
    $region39: #{pyramid_dilation_conv.3} parent=5 // pred_region
      %s540 = ssub.s32 %s9, 2
      // Predicated region
      $region41: #{pyramid_dilation_conv.3} parent=39 // pred_check
        %p541 = pneg %p122
      $region42: #{pyramid_dilation_conv.3} parent=39 // pred_check_branch
        %543 = sbr.rel (%p541) target = $region44
      $region43: #{pyramid_dilation_conv.3} parent=39 // pred_region
        %p544 = scmp.lt.s32.totalorder %s20, 1
        %s545 = scalar_select %p544, %s20, 1
        %p546 = scmp.lt.s32.totalorder %s21, 1
        %s547 = scalar_select %p546, %s21, 1
        %s548 = smul.addr %s547, 16
        %s549 = smul.addr %s545, 32
        %s550 = sadd.s32 %s548, %s549
        %s551 = smul.addr %s550, 8
        %s552 = scalar_lea.vmem %s3, %s551
      $region44: #{pyramid_dilation_conv.3} parent=39 // pred_fallthru
        _
    $region40: #{pyramid_dilation_conv.3} parent=5 // pred_fallthru
      _
  $region6: #{pyramid_dilation_conv.3} parent=0 // loop_footer
    %s13 = sadd.s32 1, %s9
  $region7: #{pyramid_dilation_conv.3} parent=0 // loop_footer_branch
    %8 = sbr.rel target = $region3
  $region8: #{pyramid_dilation_conv.3} parent=0 // loop_exit
    _

// kernel: pyramid_dilation_conv.2
$region0: #{pyramid_dilation_conv.2}
  #allocation0 [shape = 'u32[]', space=smem, size = 0x4, offset = 0x4, fixed_abs, tag = 'smem constant byte address 0x4 - core index']
  #allocation1 [shape = 'u32[144,128]{1,0:T(1,128)}', space=vmem, size = 0x12000, scoped, tag = 'internal scratch']
  #allocation2 [shape = 'bf16[8,16,36]{2,1,0:T(16,128)(2,1)}', space=vmem, size = 0x8000, scoped, tag = 'scratch operand']
  %s0 = inlined_call_operand.vmem [shape: bf16[2,2,20,28,4], index: 0, kind: input, shape index: {}]
  %s1 = inlined_call_operand.vmem [shape: bf16[36,8], index: 1, kind: input, shape index: {}]
  %s2 = inlined_call_operand.vmem [shape: f32[1,8], index: 2, kind: input, shape index: {}]
  %s3 = inlined_call_operand.vmem [shape: f32[2,2,128,8], index: 3, kind: output, shape index: {0}]
  %s4 = inlined_call_operand.vmem [shape: f32[2,2,2,8], index: 4, kind: output, shape index: {1}]
  %5 = xla_tuple %s3, %s4
  %s6 = sld [smem:[#allocation0]]
  $region53: #{pyramid_dilation_conv.2} parent=0
    _
  %s8 = ssub.s32 1, %s6
  %s9 = scalar_select 0, %s8, %s6
  loop: start=0, step=1, limit=6
  $region2: #{pyramid_dilation_conv.2} parent=0 // loop_pre_header
    _
  $region3: #{pyramid_dilation_conv.2} parent=0 // loop_header
    %s11 = sphi 0, %s15
    %p12 = scmp.ge.s32.totalorder %s11, 6
    %s18 = sphi 0, %s30
    %s19 = sphi 0, %s26
    %s20 = sphi 0, %s18
    %s21 = sphi 0, %s19
    %s22 = sphi 0, %s20
    %s23 = sphi 0, %s21
    %s35 = sphi 0, %s37
    %s38 = sphi 0, %s35
    %s39 = sphi 0, %s38
    %s55 = sphi 0, %s39
    %s59 = sphi 0, %s59
    %s61 = sphi 0, %s59
    %s62 = sphi 0, %s61
    %s76 = sphi 0, %s62
    %s80 = sphi 0, %s80
    %s82 = sphi 0, %s80
    %s83 = sphi 0, %s82
    %s97 = sphi 0, %s83
    %s105 = sphi 0, %s107
    %s108 = sphi 0, %s105
    %s109 = sphi 0, %s108
    %s125 = sphi 0, %s109
    %s133 = sphi 0, %s135
    %s136 = sphi 0, %s133
    %s137 = sphi 0, %s136
    %s153 = sphi 0, %s137
  $region4: #{pyramid_dilation_conv.2} parent=0 // loop_header_branch
    %14 = sbr.rel (%p12) target = $region8
  $region5: #{pyramid_dilation_conv.2} parent=0 // loop_body
    %s16 = ssub.s32 %s11, 1
    %s17 = ssub.s32 %s11, 2
    %s24 = sadd.s32 1, %s19
    %p25 = scmp.ge.s32.totalorder %s24, 2
    %s26 = scalar_select %p25, 0, %s24
    %s27 = sadd.s32 1, %s18
    %s28 = scalar_select %p25, %s27, %s18
    %p29 = scmp.ge.s32.totalorder %s28, 2
    %s30 = scalar_select %p29, 0, %s28
    %s31 = ssub.s32 %s18, %s30
    %s32 = ssub.s32 %s19, %s26
    %s33 = sor.u32 %s31, %s32
    %p34 = scmp.eq.s32.totalorder %s33, 0
    %s36 = sadd.s32 %s35, 1
    %s37 = scalar_select %p34, %s35, %s36
    %p40 = pneg %p34
    %p41 = scmp.eq.s32.totalorder %s11, 3
    %p42 = por %p40, %p41
    %p43 = scmp.ne.s32.totalorder %s35, %s38
    %p44 = scmp.eq.s32.totalorder %s11, 0
    %p45 = por %p43, %p44
    %p46 = scmp.ne.s32.totalorder %s35, %s38
    %p47 = scmp.eq.s32.totalorder %s16, 3
    %p48 = por %p46, %p47
    %p49 = scmp.ne.s32.totalorder %s38, %s39
    %p50 = scmp.eq.s32.totalorder %s16, 0
    %p51 = por %p49, %p50
    %p52 = scmp.ne.s32.totalorder %s38, %s39
    %p53 = scmp.eq.s32.totalorder %s17, 3
    %p54 = por %p52, %p53
    %p56 = scmp.ne.s32.totalorder %s39, %s55
    %p57 = scmp.eq.s32.totalorder %s17, 0
    %p58 = por %p56, %p57
    %s60 = sadd.s32 %s59, 1
    %p63 = scmp.eq.s32.totalorder %s11, 3
    %p64 = scmp.ne.s32.totalorder %s59, %s61
    %p65 = scmp.eq.s32.totalorder %s11, 0
    %p66 = por %p64, %p65
    %p67 = scmp.ne.s32.totalorder %s59, %s61
    %p68 = scmp.eq.s32.totalorder %s16, 3
    %p69 = por %p67, %p68
    %p70 = scmp.ne.s32.totalorder %s61, %s62
    %p71 = scmp.eq.s32.totalorder %s16, 0
    %p72 = por %p70, %p71
    %p73 = scmp.ne.s32.totalorder %s61, %s62
    %p74 = scmp.eq.s32.totalorder %s17, 3
    %p75 = por %p73, %p74
    %p77 = scmp.ne.s32.totalorder %s62, %s76
    %p78 = scmp.eq.s32.totalorder %s17, 0
    %p79 = por %p77, %p78
    %s81 = sadd.s32 %s80, 1
    %p84 = scmp.eq.s32.totalorder %s11, 3
    %p85 = scmp.ne.s32.totalorder %s80, %s82
    %p86 = scmp.eq.s32.totalorder %s11, 0
    %p87 = por %p85, %p86
    %p88 = scmp.ne.s32.totalorder %s80, %s82
    %p89 = scmp.eq.s32.totalorder %s16, 3
    %p90 = por %p88, %p89
    %p91 = scmp.ne.s32.totalorder %s82, %s83
    %p92 = scmp.eq.s32.totalorder %s16, 0
    %p93 = por %p91, %p92
    %p94 = scmp.ne.s32.totalorder %s82, %s83
    %p95 = scmp.eq.s32.totalorder %s17, 3
    %p96 = por %p94, %p95
    %p98 = scmp.ne.s32.totalorder %s83, %s97
    %p99 = scmp.eq.s32.totalorder %s17, 0
    %p100 = por %p98, %p99
    %s101 = ssub.s32 %s18, %s30
    %s102 = ssub.s32 %s19, %s26
    %s103 = sor.u32 %s101, %s102
    %p104 = scmp.eq.s32.totalorder %s103, 0
    %s106 = sadd.s32 %s105, 1
    %s107 = scalar_select %p104, %s105, %s106
    %p110 = pneg %p104
    %p111 = scmp.eq.s32.totalorder %s11, 3
    %p112 = por %p110, %p111
    %p113 = scmp.ne.s32.totalorder %s105, %s108
    %p114 = scmp.eq.s32.totalorder %s11, 0
    %p115 = por %p113, %p114
    %p116 = scmp.ne.s32.totalorder %s105, %s108
    %p117 = scmp.eq.s32.totalorder %s16, 3
    %p118 = por %p116, %p117
    %p119 = scmp.ne.s32.totalorder %s108, %s109
    %p120 = scmp.eq.s32.totalorder %s16, 0
    %p121 = por %p119, %p120
    %p122 = scmp.ne.s32.totalorder %s108, %s109
    %p123 = scmp.eq.s32.totalorder %s17, 3
    %p124 = por %p122, %p123
    %p126 = scmp.ne.s32.totalorder %s109, %s125
    %p127 = scmp.eq.s32.totalorder %s17, 0
    %p128 = por %p126, %p127
    %s129 = ssub.s32 %s18, %s30
    %s130 = ssub.s32 %s19, %s26
    %s131 = sor.u32 %s129, %s130
    %p132 = scmp.eq.s32.totalorder %s131, 0
    %s134 = sadd.s32 %s133, 1
    %s135 = scalar_select %p132, %s133, %s134
    %p138 = pneg %p132
    %p139 = scmp.eq.s32.totalorder %s11, 3
    %p140 = por %p138, %p139
    %p141 = scmp.ne.s32.totalorder %s133, %s136
    %p142 = scmp.eq.s32.totalorder %s11, 0
    %p143 = por %p141, %p142
    %p144 = scmp.ne.s32.totalorder %s133, %s136
    %p145 = scmp.eq.s32.totalorder %s16, 3
    %p146 = por %p144, %p145
    %p147 = scmp.ne.s32.totalorder %s136, %s137
    %p148 = scmp.eq.s32.totalorder %s16, 0
    %p149 = por %p147, %p148
    %p150 = scmp.ne.s32.totalorder %s136, %s137
    %p151 = scmp.eq.s32.totalorder %s17, 3
    %p152 = por %p150, %p151
    %p154 = scmp.ne.s32.totalorder %s137, %s153
    %p155 = scmp.eq.s32.totalorder %s17, 0
    %p156 = por %p154, %p155
    %p157 = scmp.le.s32.totalorder 1, %s11
    %p158 = scmp.lt.s32.totalorder %s11, 5
    %p159 = pnand %p157, %p158
    %p160 = pneg %p159
    // Predicated region
    $region9: #{pyramid_dilation_conv.2} parent=5 // pred_check
      _
    $region10: #{pyramid_dilation_conv.2} parent=5 // pred_check_branch
      %162 = sbr.rel (%p159) target = $region12
    $region11: #{pyramid_dilation_conv.2} parent=5 // pred_region
      %s163 = ssub.s32 %s11, 1
      // Predicated region
      $region13: #{pyramid_dilation_conv.2} parent=11 // pred_check
        %p164 = pneg %p72
      $region14: #{pyramid_dilation_conv.2} parent=11 // pred_check_branch
        %166 = sbr.rel (%p164) target = $region16
      $region15: #{pyramid_dilation_conv.2} parent=11 // pred_region
        _
      $region16: #{pyramid_dilation_conv.2} parent=11 // pred_fallthru
        _
      // Predicated region
      $region17: #{pyramid_dilation_conv.2} parent=11 // pred_check
        %p167 = pneg %p93
      $region18: #{pyramid_dilation_conv.2} parent=11 // pred_check_branch
        %169 = sbr.rel (%p167) target = $region20
      $region19: #{pyramid_dilation_conv.2} parent=11 // pred_region
        _
      $region20: #{pyramid_dilation_conv.2} parent=11 // pred_fallthru
        _
    $region12: #{pyramid_dilation_conv.2} parent=5 // pred_fallthru
      _
    %p170 = scmp.lt.s32.totalorder %s11, 4
    // Predicated region
    $region21: #{pyramid_dilation_conv.2} parent=5 // pred_check
      %p171 = pneg %p170
    $region22: #{pyramid_dilation_conv.2} parent=5 // pred_check_branch
      %173 = sbr.rel (%p171) target = $region24
    $region23: #{pyramid_dilation_conv.2} parent=5 // pred_region
      // Predicated region
      $region25: #{pyramid_dilation_conv.2} parent=23 // pred_check
        %p174 = pneg %p45
      $region26: #{pyramid_dilation_conv.2} parent=23 // pred_check_branch
        %176 = sbr.rel (%p174) target = $region28
      $region27: #{pyramid_dilation_conv.2} parent=23 // pred_region
        %p177 = scmp.lt.s32.totalorder %s18, 1
        %s178 = scalar_select %p177, %s18, 1
        %p179 = scmp.lt.s32.totalorder %s19, 1
        %s180 = scalar_select %p179, %s19, 1
        %s181 = smul.addr %s180, 80
        %s182 = smul.addr %s178, 160
        %s183 = sadd.s32 %s181, %s182
        %s184 = smul.addr %s183, 4
        %s185 = scalar_lea.vmem %s0, %s184
      $region28: #{pyramid_dilation_conv.2} parent=23 // pred_fallthru
        _
    $region24: #{pyramid_dilation_conv.2} parent=5 // pred_fallthru
      _
    %p186 = scmp.le.s32.totalorder 1, %s11
    %p187 = scmp.lt.s32.totalorder %s11, 5
    %p188 = pnand %p186, %p187
    %p189 = pneg %p188
    // Predicated region
    $region29: #{pyramid_dilation_conv.2} parent=5 // pred_check
      _
    $region30: #{pyramid_dilation_conv.2} parent=5 // pred_check_branch
      %191 = sbr.rel (%p188) target = $region32
    $region31: #{pyramid_dilation_conv.2} parent=5 // pred_region
      %s192 = ssub.s32 %s11, 1
      %p193 = scmp.lt.s32.totalorder %s20, 1
      %s194 = scalar_select %p193, %s20, 1
      %p195 = scmp.lt.s32.totalorder %s21, 1
      %s196 = scalar_select %p195, %s21, 1
      %s197 = smul.addr %s196, 80
      %s198 = smul.addr %s194, 160
      %s199 = sadd.s32 %s197, %s198
      %s200 = smul.addr %s199, 4
      %s201 = scalar_lea.vmem %s0, %s200
      %p202 = pneg %p51
      %p203 = pneg %p48
      %p204 = pneg %p72
      %p205 = pneg %p69
      %p206 = pneg %p93
      %p207 = pneg %p90
      %p208 = pneg %p121
      %p209 = pneg %p118
      %p210 = scmp.lt.s32.totalorder %s20, 1
      %s211 = scalar_select %p210, %s20, 1
      %p212 = scmp.lt.s32.totalorder %s21, 1
      %s213 = scalar_select %p212, %s21, 1
      %s214 = smul.addr %s213, 16
      %s215 = smul.addr %s211, 32
      %s216 = sadd.s32 %s214, %s215
      %s217 = smul.addr %s216, 8
      %s218 = scalar_lea.vmem %s3, %s217
      %p219 = pneg %p149
      %p220 = pneg %p146
      %p221 = scmp.lt.s32.totalorder %s20, 1
      %s222 = scalar_select %p221, %s20, 1
      %p223 = scmp.lt.s32.totalorder %s21, 1
      %s224 = scalar_select %p223, %s21, 1
      %s225 = smul.addr %s222, 2
      %s226 = sadd.s32 %s224, %s225
      %s227 = smul.addr %s226, 2
      %s228 = scalar_lea.vmem %s4, %s227
      %p229 = scmp.lt.s32.totalorder %s20, 1
      %s230 = scalar_select %p229, %s20, 1
      %p231 = scmp.lt.s32.totalorder %s21, 1
      %s232 = scalar_select %p231, %s21, 1
      %s233 = smul.addr %s232, 80
      %s234 = smul.addr %s230, 160
      %s235 = sadd.s32 %s233, %s234
      %s236 = smul.addr %s235, 4
      %s237 = scalar_lea.vmem %s0, %s236
      %p238 = scmp.lt.s32.totalorder %s20, 1
      %s239 = scalar_select %p238, %s20, 1
      %p240 = scmp.lt.s32.totalorder %s21, 1
      %s241 = scalar_select %p240, %s21, 1
      %s242 = smul.addr %s241, 16
      %s243 = smul.addr %s239, 32
      %s244 = sadd.s32 %s242, %s243
      %s245 = smul.addr %s244, 8
      %s246 = scalar_lea.vmem %s3, %s245
      %p247 = scmp.lt.s32.totalorder %s20, 1
      %s248 = scalar_select %p247, %s20, 1
      %p249 = scmp.lt.s32.totalorder %s21, 1
      %s250 = scalar_select %p249, %s21, 1
      %s251 = smul.addr %s248, 2
      %s252 = sadd.s32 %s250, %s251
      %s253 = smul.addr %s252, 2
      %s254 = scalar_lea.vmem %s4, %s253
      %v256 = vld [vmem:[%s237] sm:$0xf]
      %v257 = vld [vmem:[%s237 + $0x4] sm:$0xf]
      %v258 = vld [vmem:[%s237 + $0x10] sm:$0xf]
      %v259 = vld [vmem:[%s237 + $0x14] sm:$0xf]
      %v260 = vld [vmem:[%s237 + $0x20] sm:$0xf]
      %v261 = vld [vmem:[%s237 + $0x24] sm:$0xf]
      %v262 = vld [vmem:[%s237 + $0x30] sm:$0xf]
      %v263 = vld [vmem:[%s237 + $0x34] sm:$0xf]
      %v264 = vld [vmem:[%s237 + $0x40] sm:$0xf]
      %v265 = vld [vmem:[%s237 + $0x44] sm:$0xf]
      %v266 = vld [vmem:[%s237 + $0x50] sm:$0xf]
      %v267 = vld [vmem:[%s237 + $0x54] sm:$0xf]
      %v268 = vld [vmem:[%s237 + $0x60] sm:$0xf]
      %v269 = vld [vmem:[%s237 + $0x64] sm:$0xf]
      %v270 = vld [vmem:[%s237 + $0x70] sm:$0xf]
      %v271 = vld [vmem:[%s237 + $0x74] sm:$0xf]
      %v288 = vunpack.c.l.b16 %v256
      %v289 = vunpack.c.l.b16 %v257
      %v290 = vunpack.c.l.b16 %v258
      %v291 = vunpack.c.l.b16 %v259
      %v292 = vunpack.c.l.b16 %v260
      %v293 = vunpack.c.l.b16 %v261
      %v294 = vunpack.c.l.b16 %v262
      %v295 = vunpack.c.l.b16 %v263
      %v296 = vunpack.c.l.b16 %v264
      %v297 = vunpack.c.l.b16 %v265
      %v298 = vunpack.c.l.b16 %v266
      %v299 = vunpack.c.l.b16 %v267
      %v300 = vunpack.c.l.b16 %v268
      %v301 = vunpack.c.l.b16 %v269
      %v302 = vunpack.c.l.b16 %v270
      %v303 = vunpack.c.l.b16 %v271
      %v304 = vpack.c.b16 %v289, %v288
      %v305 = vpack.c.b16 %v291, %v290
      %v306 = vpack.c.b16 %v293, %v292
      %v307 = vpack.c.b16 %v295, %v294
      %v308 = vpack.c.b16 %v297, %v296
      %v309 = vpack.c.b16 %v299, %v298
      %v310 = vpack.c.b16 %v301, %v300
      %v311 = vpack.c.b16 %v303, %v302
      %vm320 = vcmask 31744
      %321 = vst.msk [vmem:[#allocation2] sm:$0xff] %vm320, %v304
      %322 = vst.msk [vmem:[#allocation2 + $0x8] sm:$0xff] %vm320, %v305
      %323 = vst.msk [vmem:[#allocation2 + $0x10] sm:$0xff] %vm320, %v306
      %324 = vst.msk [vmem:[#allocation2 + $0x18] sm:$0xff] %vm320, %v307
      %325 = vst.msk [vmem:[#allocation2 + $0x20] sm:$0xff] %vm320, %v308
      %326 = vst.msk [vmem:[#allocation2 + $0x28] sm:$0xff] %vm320, %v309
      %327 = vst.msk [vmem:[#allocation2 + $0x30] sm:$0xff] %vm320, %v310
      %328 = vst.msk [vmem:[#allocation2 + $0x38] sm:$0xff] %vm320, %v311
      %v329 = vld [vmem:[%s237] sm:$0x8]
      %v330 = vld [vmem:[%s237 + $0x4] sm:$0xf]
      %v331 = vld [vmem:[%s237 + $0x8] sm:$0x7]
      %v332 = vld [vmem:[%s237 + $0x10] sm:$0x8]
      %v333 = vld [vmem:[%s237 + $0x14] sm:$0xf]
      %v334 = vld [vmem:[%s237 + $0x18] sm:$0x7]
      %v335 = vld [vmem:[%s237 + $0x20] sm:$0x8]
      %v336 = vld [vmem:[%s237 + $0x24] sm:$0xf]
      %v337 = vld [vmem:[%s237 + $0x28] sm:$0x7]
      %v338 = vld [vmem:[%s237 + $0x30] sm:$0x8]
      %v339 = vld [vmem:[%s237 + $0x34] sm:$0xf]
      %v340 = vld [vmem:[%s237 + $0x38] sm:$0x7]
      %v341 = vld [vmem:[%s237 + $0x40] sm:$0x8]
      %v342 = vld [vmem:[%s237 + $0x44] sm:$0xf]
      %v343 = vld [vmem:[%s237 + $0x48] sm:$0x7]
      %v344 = vld [vmem:[%s237 + $0x50] sm:$0x8]
      %v345 = vld [vmem:[%s237 + $0x54] sm:$0xf]
      %v346 = vld [vmem:[%s237 + $0x58] sm:$0x7]
      %v347 = vld [vmem:[%s237 + $0x60] sm:$0x8]
      %v348 = vld [vmem:[%s237 + $0x64] sm:$0xf]
      %v349 = vld [vmem:[%s237 + $0x68] sm:$0x7]
      %v350 = vld [vmem:[%s237 + $0x70] sm:$0x8]
      %v351 = vld [vmem:[%s237 + $0x74] sm:$0xf]
      %v352 = vld [vmem:[%s237 + $0x78] sm:$0x7]
      %v377 = vunpack.c.l.b16 %v329
      %v378 = vunpack.c.l.b16 %v330
      %v379 = vunpack.c.l.b16 %v331
      %v380 = vunpack.c.l.b16 %v332
      %v381 = vunpack.c.l.b16 %v333
      %v382 = vunpack.c.l.b16 %v334
      %v383 = vunpack.c.l.b16 %v335
      %v384 = vunpack.c.l.b16 %v336
      %v385 = vunpack.c.l.b16 %v337
      %v386 = vunpack.c.l.b16 %v338
      %v387 = vunpack.c.l.b16 %v339
      %v388 = vunpack.c.l.b16 %v340
      %v389 = vunpack.c.l.b16 %v341
      %v390 = vunpack.c.l.b16 %v342
      %v391 = vunpack.c.l.b16 %v343
      %v392 = vunpack.c.l.b16 %v344
      %v393 = vunpack.c.l.b16 %v345
      %v394 = vunpack.c.l.b16 %v346
      %v395 = vunpack.c.l.b16 %v347
      %v396 = vunpack.c.l.b16 %v348
      %v397 = vunpack.c.l.b16 %v349
      %v398 = vunpack.c.l.b16 %v350
      %v399 = vunpack.c.l.b16 %v351
      %v400 = vunpack.c.l.b16 %v352
      %v401 = vpack.c.b16 %v378, %v377
      %v402 = vpack.c.b16 %v379, %v379
      %v403 = vpack.c.b16 %v381, %v380
      %v404 = vpack.c.b16 %v382, %v382
      %v405 = vpack.c.b16 %v384, %v383
      %v406 = vpack.c.b16 %v385, %v385
      %v407 = vpack.c.b16 %v387, %v386
      %v408 = vpack.c.b16 %v388, %v388
      %v409 = vpack.c.b16 %v390, %v389
      %v410 = vpack.c.b16 %v391, %v391
      %v411 = vpack.c.b16 %v393, %v392
      %v412 = vpack.c.b16 %v394, %v394
      %v413 = vpack.c.b16 %v396, %v395
      %v414 = vpack.c.b16 %v397, %v397
      %v415 = vpack.c.b16 %v399, %v398
      %v416 = vpack.c.b16 %v400, %v400
      %vm417 = vcmask 1044480
      %v418 = vrot.slane %v401, 3
      %v419 = vrot.slane %v402, 3
      %v420 = vsel %vm417, %v418, %v419
      %v421 = vrot.slane %v403, 3
      %v422 = vrot.slane %v404, 3
      %v423 = vsel %vm417, %v421, %v422
      %v424 = vrot.slane %v405, 3
      %v425 = vrot.slane %v406, 3
      %v426 = vsel %vm417, %v424, %v425
      %v427 = vrot.slane %v407, 3
      %v428 = vrot.slane %v408, 3
      %v429 = vsel %vm417, %v427, %v428
      %v430 = vrot.slane %v409, 3
      %v431 = vrot.slane %v410, 3
      %v432 = vsel %vm417, %v430, %v431
      %v433 = vrot.slane %v411, 3
      %v434 = vrot.slane %v412, 3
      %v435 = vsel %vm417, %v433, %v434
      %v436 = vrot.slane %v413, 3
      %v437 = vrot.slane %v414, 3
      %v438 = vsel %vm417, %v436, %v437
      %v439 = vrot.slane %v415, 3
      %v440 = vrot.slane %v416, 3
      %v441 = vsel %vm417, %v439, %v440
      %442 = vrot.lane.b32.xlu0 %v420, 4
      %v443 = vpop.permute.xlu0 %442
      %444 = vrot.lane.b32.xlu0 %v423, 4
      %v445 = vpop.permute.xlu0 %444
      %446 = vrot.lane.b32.xlu0 %v426, 4
      %v447 = vpop.permute.xlu0 %446
      %448 = vrot.lane.b32.xlu0 %v429, 4
      %v449 = vpop.permute.xlu0 %448
      %450 = vrot.lane.b32.xlu0 %v432, 4
      %v451 = vpop.permute.xlu0 %450
      %452 = vrot.lane.b32.xlu0 %v435, 4
      %v453 = vpop.permute.xlu0 %452
      %454 = vrot.lane.b32.xlu0 %v438, 4
      %v455 = vpop.permute.xlu0 %454
      %456 = vrot.lane.b32.xlu0 %v441, 4
      %v457 = vpop.permute.xlu0 %456
      %vm466 = vcmask 64544
      %467 = vst.msk [vmem:[#allocation2] sm:$0xff] %vm466, %v443
      %468 = vst.msk [vmem:[#allocation2 + $0x8] sm:$0xff] %vm466, %v445
      %469 = vst.msk [vmem:[#allocation2 + $0x10] sm:$0xff] %vm466, %v447
      %470 = vst.msk [vmem:[#allocation2 + $0x18] sm:$0xff] %vm466, %v449
      %471 = vst.msk [vmem:[#allocation2 + $0x20] sm:$0xff] %vm466, %v451
      %472 = vst.msk [vmem:[#allocation2 + $0x28] sm:$0xff] %vm466, %v453
      %473 = vst.msk [vmem:[#allocation2 + $0x30] sm:$0xff] %vm466, %v455
      %474 = vst.msk [vmem:[#allocation2 + $0x38] sm:$0xff] %vm466, %v457
      %v475 = vld [vmem:[%s237 + $0x4] sm:$0xc]
      %v476 = vld [vmem:[%s237 + $0x8] sm:$0xf]
      %v477 = vld [vmem:[%s237 + $0xc] sm:$0x3]
      %v478 = vld [vmem:[%s237 + $0x14] sm:$0xc]
      %v479 = vld [vmem:[%s237 + $0x18] sm:$0xf]
      %v480 = vld [vmem:[%s237 + $0x1c] sm:$0x3]
      %v481 = vld [vmem:[%s237 + $0x24] sm:$0xc]
      %v482 = vld [vmem:[%s237 + $0x28] sm:$0xf]
      %v483 = vld [vmem:[%s237 + $0x2c] sm:$0x3]
      %v484 = vld [vmem:[%s237 + $0x34] sm:$0xc]
      %v485 = vld [vmem:[%s237 + $0x38] sm:$0xf]
      %v486 = vld [vmem:[%s237 + $0x3c] sm:$0x3]
      %v487 = vld [vmem:[%s237 + $0x44] sm:$0xc]
      %v488 = vld [vmem:[%s237 + $0x48] sm:$0xf]
      %v489 = vld [vmem:[%s237 + $0x4c] sm:$0x3]
      %v490 = vld [vmem:[%s237 + $0x54] sm:$0xc]
      %v491 = vld [vmem:[%s237 + $0x58] sm:$0xf]
      %v492 = vld [vmem:[%s237 + $0x5c] sm:$0x3]
      %v493 = vld [vmem:[%s237 + $0x64] sm:$0xc]
      %v494 = vld [vmem:[%s237 + $0x68] sm:$0xf]
      %v495 = vld [vmem:[%s237 + $0x6c] sm:$0x3]
      %v496 = vld [vmem:[%s237 + $0x74] sm:$0xc]
      %v497 = vld [vmem:[%s237 + $0x78] sm:$0xf]
      %v498 = vld [vmem:[%s237 + $0x7c] sm:$0x3]
      %v523 = vunpack.c.l.b16 %v475
      %v524 = vunpack.c.l.b16 %v476
      %v525 = vunpack.c.l.b16 %v477
      %v526 = vunpack.c.l.b16 %v478
      %v527 = vunpack.c.l.b16 %v479
      %v528 = vunpack.c.l.b16 %v480
      %v529 = vunpack.c.l.b16 %v481
      %v530 = vunpack.c.l.b16 %v482
      %v531 = vunpack.c.l.b16 %v483
      %v532 = vunpack.c.l.b16 %v484
      %v533 = vunpack.c.l.b16 %v485
      %v534 = vunpack.c.l.b16 %v486
      %v535 = vunpack.c.l.b16 %v487
      %v536 = vunpack.c.l.b16 %v488
      %v537 = vunpack.c.l.b16 %v489
      %v538 = vunpack.c.l.b16 %v490
      %v539 = vunpack.c.l.b16 %v491
      %v540 = vunpack.c.l.b16 %v492
      %v541 = vunpack.c.l.b16 %v493
      %v542 = vunpack.c.l.b16 %v494
      %v543 = vunpack.c.l.b16 %v495
      %v544 = vunpack.c.l.b16 %v496
      %v545 = vunpack.c.l.b16 %v497
      %v546 = vunpack.c.l.b16 %v498
      %v547 = vpack.c.b16 %v524, %v523
      %v548 = vpack.c.b16 %v525, %v525
      %v549 = vpack.c.b16 %v527, %v526
      %v550 = vpack.c.b16 %v528, %v528
      %v551 = vpack.c.b16 %v530, %v529
      %v552 = vpack.c.b16 %v531, %v531
      %v553 = vpack.c.b16 %v533, %v532
      %v554 = vpack.c.b16 %v534, %v534
      %v555 = vpack.c.b16 %v536, %v535
      %v556 = vpack.c.b16 %v537, %v537
      %v557 = vpack.c.b16 %v539, %v538
      %v558 = vpack.c.b16 %v540, %v540
      %v559 = vpack.c.b16 %v542, %v541
      %v560 = vpack.c.b16 %v543, %v543
      %v561 = vpack.c.b16 %v545, %v544
      %v562 = vpack.c.b16 %v546, %v546
      %vm563 = vcmask 1045504
      %v564 = vrot.slane %v547, 2
      %v565 = vrot.slane %v548, 2
      %v566 = vsel %vm563, %v564, %v565
      %v567 = vrot.slane %v549, 2
      %v568 = vrot.slane %v550, 2
      %v569 = vsel %vm563, %v567, %v568
      %v570 = vrot.slane %v551, 2
      %v571 = vrot.slane %v552, 2
      %v572 = vsel %vm563, %v570, %v571
      %v573 = vrot.slane %v553, 2
      %v574 = vrot.slane %v554, 2
      %v575 = vsel %vm563, %v573, %v574
      %v576 = vrot.slane %v555, 2
      %v577 = vrot.slane %v556, 2
      %v578 = vsel %vm563, %v576, %v577
      %v579 = vrot.slane %v557, 2
      %v580 = vrot.slane %v558, 2
      %v581 = vsel %vm563, %v579, %v580
      %v582 = vrot.slane %v559, 2
      %v583 = vrot.slane %v560, 2
      %v584 = vsel %vm563, %v582, %v583
      %v585 = vrot.slane %v561, 2
      %v586 = vrot.slane %v562, 2
      %v587 = vsel %vm563, %v585, %v586
      %588 = vrot.lane.b32.xlu0 %v566, 8
      %v589 = vpop.permute.xlu0 %588
      %590 = vrot.lane.b32.xlu0 %v569, 8
      %v591 = vpop.permute.xlu0 %590
      %592 = vrot.lane.b32.xlu0 %v572, 8
      %v593 = vpop.permute.xlu0 %592
      %594 = vrot.lane.b32.xlu0 %v575, 8
      %v595 = vpop.permute.xlu0 %594
      %596 = vrot.lane.b32.xlu0 %v578, 8
      %v597 = vpop.permute.xlu0 %596
      %598 = vrot.lane.b32.xlu0 %v581, 8
      %v599 = vpop.permute.xlu0 %598
      %600 = vrot.lane.b32.xlu0 %v584, 8
      %v601 = vpop.permute.xlu0 %600
      %602 = vrot.lane.b32.xlu0 %v587, 8
      %v603 = vpop.permute.xlu0 %602
      %vm612 = vcmask 97344
      %613 = vst.msk [vmem:[#allocation2] sm:$0xff] %vm612, %v589
      %614 = vst.msk [vmem:[#allocation2 + $0x8] sm:$0xff] %vm612, %v591
      %615 = vst.msk [vmem:[#allocation2 + $0x10] sm:$0xff] %vm612, %v593
      %616 = vst.msk [vmem:[#allocation2 + $0x18] sm:$0xff] %vm612, %v595
      %617 = vst.msk [vmem:[#allocation2 + $0x20] sm:$0xff] %vm612, %v597
      %618 = vst.msk [vmem:[#allocation2 + $0x28] sm:$0xff] %vm612, %v599
      %619 = vst.msk [vmem:[#allocation2 + $0x30] sm:$0xff] %vm612, %v601
      %620 = vst.msk [vmem:[#allocation2 + $0x38] sm:$0xff] %vm612, %v603
      %s621 = scalar_lea.vmem %s237, 96
      %v622 = vld [vmem:[%s621] sm:$0xf]
      %v623 = vld [vmem:[%s621 + $0x4] sm:$0xf]
      %v624 = vld [vmem:[%s621 + $0x10] sm:$0xf]
      %v625 = vld [vmem:[%s621 + $0x14] sm:$0xf]
      %v626 = vld [vmem:[%s621 + $0x20] sm:$0xf]
      %v627 = vld [vmem:[%s621 + $0x24] sm:$0xf]
      %v628 = vld [vmem:[%s621 + $0x30] sm:$0xf]
      %v629 = vld [vmem:[%s621 + $0x34] sm:$0xf]
      %v630 = vld [vmem:[%s621 + $0x40] sm:$0xf]
      %v631 = vld [vmem:[%s621 + $0x44] sm:$0xf]
      %v632 = vld [vmem:[%s621 + $0x50] sm:$0xf]
      %v633 = vld [vmem:[%s621 + $0x54] sm:$0xf]
      %v634 = vld [vmem:[%s621 + $0x60] sm:$0xf]
      %v635 = vld [vmem:[%s621 + $0x64] sm:$0xf]
      %v636 = vld [vmem:[%s621 + $0x70] sm:$0xf]
      %v637 = vld [vmem:[%s621 + $0x74] sm:$0xf]
      %v654 = vunpack.c.l.b16 %v622
      %v655 = vunpack.c.l.b16 %v623
      %v656 = vunpack.c.l.b16 %v624
      %v657 = vunpack.c.l.b16 %v625
      %v658 = vunpack.c.l.b16 %v626
      %v659 = vunpack.c.l.b16 %v627
      %v660 = vunpack.c.l.b16 %v628
      %v661 = vunpack.c.l.b16 %v629
      %v662 = vunpack.c.l.b16 %v630
      %v663 = vunpack.c.l.b16 %v631
      %v664 = vunpack.c.l.b16 %v632
      %v665 = vunpack.c.l.b16 %v633
      %v666 = vunpack.c.l.b16 %v634
      %v667 = vunpack.c.l.b16 %v635
      %v668 = vunpack.c.l.b16 %v636
      %v669 = vunpack.c.l.b16 %v637
      %v670 = vpack.c.b16 %v655, %v654
      %v671 = vpack.c.b16 %v657, %v656
      %v672 = vpack.c.b16 %v659, %v658
      %v673 = vpack.c.b16 %v661, %v660
      %v674 = vpack.c.b16 %v663, %v662
      %v675 = vpack.c.b16 %v665, %v664
      %v676 = vpack.c.b16 %v667, %v666
      %v677 = vpack.c.b16 %v669, %v668
      %678 = vrot.lane.b32.xlu0 %v670, 12
      %v679 = vpop.permute.xlu0 %678
      %680 = vrot.lane.b32.xlu0 %v671, 12
      %v681 = vpop.permute.xlu0 %680
      %682 = vrot.lane.b32.xlu0 %v672, 12
      %v683 = vpop.permute.xlu0 %682
      %684 = vrot.lane.b32.xlu0 %v673, 12
      %v685 = vpop.permute.xlu0 %684
      %686 = vrot.lane.b32.xlu0 %v674, 12
      %v687 = vpop.permute.xlu0 %686
      %688 = vrot.lane.b32.xlu0 %v675, 12
      %v689 = vpop.permute.xlu0 %688
      %690 = vrot.lane.b32.xlu0 %v676, 12
      %v691 = vpop.permute.xlu0 %690
      %692 = vrot.lane.b32.xlu0 %v677, 12
      %v693 = vpop.permute.xlu0 %692
      %vm702 = vcmask 130144
      %703 = vst.msk [vmem:[#allocation2] sm:$0xff] %vm702, %v679
      %704 = vst.msk [vmem:[#allocation2 + $0x8] sm:$0xff] %vm702, %v681
      %705 = vst.msk [vmem:[#allocation2 + $0x10] sm:$0xff] %vm702, %v683
      %706 = vst.msk [vmem:[#allocation2 + $0x18] sm:$0xff] %vm702, %v685
      %707 = vst.msk [vmem:[#allocation2 + $0x20] sm:$0xff] %vm702, %v687
      %708 = vst.msk [vmem:[#allocation2 + $0x28] sm:$0xff] %vm702, %v689
      %709 = vst.msk [vmem:[#allocation2 + $0x30] sm:$0xff] %vm702, %v691
      %710 = vst.msk [vmem:[#allocation2 + $0x38] sm:$0xff] %vm702, %v693
      %v711 = vld [vmem:[%s621] sm:$0x8]
      %v712 = vld [vmem:[%s621 + $0x4] sm:$0xf]
      %v713 = vld [vmem:[%s621 + $0x8] sm:$0x7]
      %v714 = vld [vmem:[%s621 + $0x10] sm:$0x8]
      %v715 = vld [vmem:[%s621 + $0x14] sm:$0xf]
      %v716 = vld [vmem:[%s621 + $0x18] sm:$0x7]
      %v717 = vld [vmem:[%s621 + $0x20] sm:$0x8]
      %v718 = vld [vmem:[%s621 + $0x24] sm:$0xf]
      %v719 = vld [vmem:[%s621 + $0x28] sm:$0x7]
      %v720 = vld [vmem:[%s621 + $0x30] sm:$0x8]
      %v721 = vld [vmem:[%s621 + $0x34] sm:$0xf]
      %v722 = vld [vmem:[%s621 + $0x38] sm:$0x7]
      %v723 = vld [vmem:[%s621 + $0x40] sm:$0x8]
      %v724 = vld [vmem:[%s621 + $0x44] sm:$0xf]
      %v725 = vld [vmem:[%s621 + $0x48] sm:$0x7]
      %v726 = vld [vmem:[%s621 + $0x50] sm:$0x8]
      %v727 = vld [vmem:[%s621 + $0x54] sm:$0xf]
      %v728 = vld [vmem:[%s621 + $0x58] sm:$0x7]
      %v729 = vld [vmem:[%s621 + $0x60] sm:$0x8]
      %v730 = vld [vmem:[%s621 + $0x64] sm:$0xf]
      %v731 = vld [vmem:[%s621 + $0x68] sm:$0x7]
      %v732 = vld [vmem:[%s621 + $0x70] sm:$0x8]
      %v733 = vld [vmem:[%s621 + $0x74] sm:$0xf]
      %v734 = vld [vmem:[%s621 + $0x78] sm:$0x7]
      %v759 = vunpack.c.l.b16 %v711
      %v760 = vunpack.c.l.b16 %v712
      %v761 = vunpack.c.l.b16 %v713
      %v762 = vunpack.c.l.b16 %v714
      %v763 = vunpack.c.l.b16 %v715
      %v764 = vunpack.c.l.b16 %v716
      %v765 = vunpack.c.l.b16 %v717
      %v766 = vunpack.c.l.b16 %v718
      %v767 = vunpack.c.l.b16 %v719
      %v768 = vunpack.c.l.b16 %v720
      %v769 = vunpack.c.l.b16 %v721
      %v770 = vunpack.c.l.b16 %v722
      %v771 = vunpack.c.l.b16 %v723
      %v772 = vunpack.c.l.b16 %v724
      %v773 = vunpack.c.l.b16 %v725
      %v774 = vunpack.c.l.b16 %v726
      %v775 = vunpack.c.l.b16 %v727
      %v776 = vunpack.c.l.b16 %v728
      %v777 = vunpack.c.l.b16 %v729
      %v778 = vunpack.c.l.b16 %v730
      %v779 = vunpack.c.l.b16 %v731
      %v780 = vunpack.c.l.b16 %v732
      %v781 = vunpack.c.l.b16 %v733
      %v782 = vunpack.c.l.b16 %v734
      %v783 = vpack.c.b16 %v760, %v759
      %v784 = vpack.c.b16 %v761, %v761
      %v785 = vpack.c.b16 %v763, %v762
      %v786 = vpack.c.b16 %v764, %v764
      %v787 = vpack.c.b16 %v766, %v765
      %v788 = vpack.c.b16 %v767, %v767
      %v789 = vpack.c.b16 %v769, %v768
      %v790 = vpack.c.b16 %v770, %v770
      %v791 = vpack.c.b16 %v772, %v771
      %v792 = vpack.c.b16 %v773, %v773
      %v793 = vpack.c.b16 %v775, %v774
      %v794 = vpack.c.b16 %v776, %v776
      %v795 = vpack.c.b16 %v778, %v777
      %v796 = vpack.c.b16 %v779, %v779
      %v797 = vpack.c.b16 %v781, %v780
      %v798 = vpack.c.b16 %v782, %v782
      %v799 = vrot.slane %v783, 3
      %v800 = vrot.slane %v784, 3
      %v801 = vsel %vm417, %v799, %v800
      %v802 = vrot.slane %v785, 3
      %v803 = vrot.slane %v786, 3
      %v804 = vsel %vm417, %v802, %v803
      %v805 = vrot.slane %v787, 3
      %v806 = vrot.slane %v788, 3
      %v807 = vsel %vm417, %v805, %v806
      %v808 = vrot.slane %v789, 3
      %v809 = vrot.slane %v790, 3
      %v810 = vsel %vm417, %v808, %v809
      %v811 = vrot.slane %v791, 3
      %v812 = vrot.slane %v792, 3
      %v813 = vsel %vm417, %v811, %v812
      %v814 = vrot.slane %v793, 3
      %v815 = vrot.slane %v794, 3
      %v816 = vsel %vm417, %v814, %v815
      %v817 = vrot.slane %v795, 3
      %v818 = vrot.slane %v796, 3
      %v819 = vsel %vm417, %v817, %v818
      %v820 = vrot.slane %v797, 3
      %v821 = vrot.slane %v798, 3
      %v822 = vsel %vm417, %v820, %v821
      %823 = vrot.lane.b32.xlu0 %v801, 16
      %v824 = vpop.permute.xlu0 %823
      %825 = vrot.lane.b32.xlu0 %v804, 16
      %v826 = vpop.permute.xlu0 %825
      %827 = vrot.lane.b32.xlu0 %v807, 16
      %v828 = vpop.permute.xlu0 %827
      %829 = vrot.lane.b32.xlu0 %v810, 16
      %v830 = vpop.permute.xlu0 %829
      %831 = vrot.lane.b32.xlu0 %v813, 16
      %v832 = vpop.permute.xlu0 %831
      %833 = vrot.lane.b32.xlu0 %v816, 16
      %v834 = vpop.permute.xlu0 %833
      %835 = vrot.lane.b32.xlu0 %v819, 16
      %v836 = vpop.permute.xlu0 %835
      %837 = vrot.lane.b32.xlu0 %v822, 16
      %v838 = vpop.permute.xlu0 %837
      %vm847 = vcmask 162944
      %848 = vst.msk [vmem:[#allocation2] sm:$0xff] %vm847, %v824
      %849 = vst.msk [vmem:[#allocation2 + $0x8] sm:$0xff] %vm847, %v826
      %850 = vst.msk [vmem:[#allocation2 + $0x10] sm:$0xff] %vm847, %v828
      %851 = vst.msk [vmem:[#allocation2 + $0x18] sm:$0xff] %vm847, %v830
      %852 = vst.msk [vmem:[#allocation2 + $0x20] sm:$0xff] %vm847, %v832
      %853 = vst.msk [vmem:[#allocation2 + $0x28] sm:$0xff] %vm847, %v834
      %854 = vst.msk [vmem:[#allocation2 + $0x30] sm:$0xff] %vm847, %v836
      %855 = vst.msk [vmem:[#allocation2 + $0x38] sm:$0xff] %vm847, %v838
      %v856 = vld [vmem:[%s621 + $0x4] sm:$0xc]
      %v857 = vld [vmem:[%s621 + $0x8] sm:$0xf]
      %v858 = vld [vmem:[%s621 + $0xc] sm:$0x3]
      %v859 = vld [vmem:[%s621 + $0x14] sm:$0xc]
      %v860 = vld [vmem:[%s621 + $0x18] sm:$0xf]
      %v861 = vld [vmem:[%s621 + $0x1c] sm:$0x3]
      %v862 = vld [vmem:[%s621 + $0x24] sm:$0xc]
      %v863 = vld [vmem:[%s621 + $0x28] sm:$0xf]
      %v864 = vld [vmem:[%s621 + $0x2c] sm:$0x3]
      %v865 = vld [vmem:[%s621 + $0x34] sm:$0xc]
      %v866 = vld [vmem:[%s621 + $0x38] sm:$0xf]
      %v867 = vld [vmem:[%s621 + $0x3c] sm:$0x3]
      %v868 = vld [vmem:[%s621 + $0x44] sm:$0xc]
      %v869 = vld [vmem:[%s621 + $0x48] sm:$0xf]
      %v870 = vld [vmem:[%s621 + $0x4c] sm:$0x3]
      %v871 = vld [vmem:[%s621 + $0x54] sm:$0xc]
      %v872 = vld [vmem:[%s621 + $0x58] sm:$0xf]
      %v873 = vld [vmem:[%s621 + $0x5c] sm:$0x3]
      %v874 = vld [vmem:[%s621 + $0x64] sm:$0xc]
      %v875 = vld [vmem:[%s621 + $0x68] sm:$0xf]
      %v876 = vld [vmem:[%s621 + $0x6c] sm:$0x3]
      %v877 = vld [vmem:[%s621 + $0x74] sm:$0xc]
      %v878 = vld [vmem:[%s621 + $0x78] sm:$0xf]
      %v879 = vld [vmem:[%s621 + $0x7c] sm:$0x3]
      %v904 = vunpack.c.l.b16 %v856
      %v905 = vunpack.c.l.b16 %v857
      %v906 = vunpack.c.l.b16 %v858
      %v907 = vunpack.c.l.b16 %v859
      %v908 = vunpack.c.l.b16 %v860
      %v909 = vunpack.c.l.b16 %v861
      %v910 = vunpack.c.l.b16 %v862
      %v911 = vunpack.c.l.b16 %v863
      %v912 = vunpack.c.l.b16 %v864
      %v913 = vunpack.c.l.b16 %v865
      %v914 = vunpack.c.l.b16 %v866
      %v915 = vunpack.c.l.b16 %v867
      %v916 = vunpack.c.l.b16 %v868
      %v917 = vunpack.c.l.b16 %v869
      %v918 = vunpack.c.l.b16 %v870
      %v919 = vunpack.c.l.b16 %v871
      %v920 = vunpack.c.l.b16 %v872
      %v921 = vunpack.c.l.b16 %v873
      %v922 = vunpack.c.l.b16 %v874
      %v923 = vunpack.c.l.b16 %v875
      %v924 = vunpack.c.l.b16 %v876
      %v925 = vunpack.c.l.b16 %v877
      %v926 = vunpack.c.l.b16 %v878
      %v927 = vunpack.c.l.b16 %v879
      %v928 = vpack.c.b16 %v905, %v904
      %v929 = vpack.c.b16 %v906, %v906
      %v930 = vpack.c.b16 %v908, %v907
      %v931 = vpack.c.b16 %v909, %v909
      %v932 = vpack.c.b16 %v911, %v910
      %v933 = vpack.c.b16 %v912, %v912
      %v934 = vpack.c.b16 %v914, %v913
      %v935 = vpack.c.b16 %v915, %v915
      %v936 = vpack.c.b16 %v917, %v916
      %v937 = vpack.c.b16 %v918, %v918
      %v938 = vpack.c.b16 %v920, %v919
      %v939 = vpack.c.b16 %v921, %v921
      %v940 = vpack.c.b16 %v923, %v922
      %v941 = vpack.c.b16 %v924, %v924
      %v942 = vpack.c.b16 %v926, %v925
      %v943 = vpack.c.b16 %v927, %v927
      %v944 = vrot.slane %v928, 2
      %v945 = vrot.slane %v929, 2
      %v946 = vsel %vm563, %v944, %v945
      %v947 = vrot.slane %v930, 2
      %v948 = vrot.slane %v931, 2
      %v949 = vsel %vm563, %v947, %v948
      %v950 = vrot.slane %v932, 2
      %v951 = vrot.slane %v933, 2
      %v952 = vsel %vm563, %v950, %v951
      %v953 = vrot.slane %v934, 2
      %v954 = vrot.slane %v935, 2
      %v955 = vsel %vm563, %v953, %v954
      %v956 = vrot.slane %v936, 2
      %v957 = vrot.slane %v937, 2
      %v958 = vsel %vm563, %v956, %v957
      %v959 = vrot.slane %v938, 2
      %v960 = vrot.slane %v939, 2
      %v961 = vsel %vm563, %v959, %v960
      %v962 = vrot.slane %v940, 2
      %v963 = vrot.slane %v941, 2
      %v964 = vsel %vm563, %v962, %v963
      %v965 = vrot.slane %v942, 2
      %v966 = vrot.slane %v943, 2
      %v967 = vsel %vm563, %v965, %v966
      %968 = vrot.lane.b32.xlu0 %v946, 20
      %v969 = vpop.permute.xlu0 %968
      %970 = vrot.lane.b32.xlu0 %v949, 20
      %v971 = vpop.permute.xlu0 %970
      %972 = vrot.lane.b32.xlu0 %v952, 20
      %v973 = vpop.permute.xlu0 %972
      %974 = vrot.lane.b32.xlu0 %v955, 20
      %v975 = vpop.permute.xlu0 %974
      %976 = vrot.lane.b32.xlu0 %v958, 20
      %v977 = vpop.permute.xlu0 %976
      %978 = vrot.lane.b32.xlu0 %v961, 20
      %v979 = vpop.permute.xlu0 %978
      %980 = vrot.lane.b32.xlu0 %v964, 20
      %v981 = vpop.permute.xlu0 %980
      %982 = vrot.lane.b32.xlu0 %v967, 20
      %v983 = vpop.permute.xlu0 %982
      %vm992 = vcmask 195744
      %993 = vst.msk [vmem:[#allocation2] sm:$0xff] %vm992, %v969
      %994 = vst.msk [vmem:[#allocation2 + $0x8] sm:$0xff] %vm992, %v971
      %995 = vst.msk [vmem:[#allocation2 + $0x10] sm:$0xff] %vm992, %v973
      %996 = vst.msk [vmem:[#allocation2 + $0x18] sm:$0xff] %vm992, %v975
      %997 = vst.msk [vmem:[#allocation2 + $0x20] sm:$0xff] %vm992, %v977
      %998 = vst.msk [vmem:[#allocation2 + $0x28] sm:$0xff] %vm992, %v979
      %999 = vst.msk [vmem:[#allocation2 + $0x30] sm:$0xff] %vm992, %v981
      %1000 = vst.msk [vmem:[#allocation2 + $0x38] sm:$0xff] %vm992, %v983
      %s1001 = scalar_lea.vmem %s237, 192
      %v1002 = vld [vmem:[%s1001] sm:$0xf]
      %v1003 = vld [vmem:[%s1001 + $0x4] sm:$0xf]
      %v1004 = vld [vmem:[%s1001 + $0x10] sm:$0xf]
      %v1005 = vld [vmem:[%s1001 + $0x14] sm:$0xf]
      %v1006 = vld [vmem:[%s1001 + $0x20] sm:$0xf]
      %v1007 = vld [vmem:[%s1001 + $0x24] sm:$0xf]
      %v1008 = vld [vmem:[%s1001 + $0x30] sm:$0xf]
      %v1009 = vld [vmem:[%s1001 + $0x34] sm:$0xf]
      %v1010 = vld [vmem:[%s1001 + $0x40] sm:$0xf]
      %v1011 = vld [vmem:[%s1001 + $0x44] sm:$0xf]
      %v1012 = vld [vmem:[%s1001 + $0x50] sm:$0xf]
      %v1013 = vld [vmem:[%s1001 + $0x54] sm:$0xf]
      %v1014 = vld [vmem:[%s1001 + $0x60] sm:$0xf]
      %v1015 = vld [vmem:[%s1001 + $0x64] sm:$0xf]
      %v1016 = vld [vmem:[%s1001 + $0x70] sm:$0xf]
      %v1017 = vld [vmem:[%s1001 + $0x74] sm:$0xf]
      %v1034 = vunpack.c.l.b16 %v1002
      %v1035 = vunpack.c.l.b16 %v1003
      %v1036 = vunpack.c.l.b16 %v1004
      %v1037 = vunpack.c.l.b16 %v1005
      %v1038 = vunpack.c.l.b16 %v1006
      %v1039 = vunpack.c.l.b16 %v1007
      %v1040 = vunpack.c.l.b16 %v1008
      %v1041 = vunpack.c.l.b16 %v1009
      %v1042 = vunpack.c.l.b16 %v1010
      %v1043 = vunpack.c.l.b16 %v1011
      %v1044 = vunpack.c.l.b16 %v1012
      %v1045 = vunpack.c.l.b16 %v1013
      %v1046 = vunpack.c.l.b16 %v1014
      %v1047 = vunpack.c.l.b16 %v1015
      %v1048 = vunpack.c.l.b16 %v1016
      %v1049 = vunpack.c.l.b16 %v1017
      %v1050 = vpack.c.b16 %v1035, %v1034
      %v1051 = vpack.c.b16 %v1037, %v1036
      %v1052 = vpack.c.b16 %v1039, %v1038
      %v1053 = vpack.c.b16 %v1041, %v1040
      %v1054 = vpack.c.b16 %v1043, %v1042
      %v1055 = vpack.c.b16 %v1045, %v1044
      %v1056 = vpack.c.b16 %v1047, %v1046
      %v1057 = vpack.c.b16 %v1049, %v1048
      %1058 = vrot.lane.b32.xlu0 %v1050, 24
      %v1059 = vpop.permute.xlu0 %1058
      %1060 = vrot.lane.b32.xlu0 %v1051, 24
      %v1061 = vpop.permute.xlu0 %1060
      %1062 = vrot.lane.b32.xlu0 %v1052, 24
      %v1063 = vpop.permute.xlu0 %1062
      %1064 = vrot.lane.b32.xlu0 %v1053, 24
      %v1065 = vpop.permute.xlu0 %1064
      %1066 = vrot.lane.b32.xlu0 %v1054, 24
      %v1067 = vpop.permute.xlu0 %1066
      %1068 = vrot.lane.b32.xlu0 %v1055, 24
      %v1069 = vpop.permute.xlu0 %1068
      %1070 = vrot.lane.b32.xlu0 %v1056, 24
      %v1071 = vpop.permute.xlu0 %1070
      %1072 = vrot.lane.b32.xlu0 %v1057, 24
      %v1073 = vpop.permute.xlu0 %1072
      %vm1082 = vcmask 228544
      %1083 = vst.msk [vmem:[#allocation2] sm:$0xff] %vm1082, %v1059
      %1084 = vst.msk [vmem:[#allocation2 + $0x8] sm:$0xff] %vm1082, %v1061
      %1085 = vst.msk [vmem:[#allocation2 + $0x10] sm:$0xff] %vm1082, %v1063
      %1086 = vst.msk [vmem:[#allocation2 + $0x18] sm:$0xff] %vm1082, %v1065
      %1087 = vst.msk [vmem:[#allocation2 + $0x20] sm:$0xff] %vm1082, %v1067
      %1088 = vst.msk [vmem:[#allocation2 + $0x28] sm:$0xff] %vm1082, %v1069
      %1089 = vst.msk [vmem:[#allocation2 + $0x30] sm:$0xff] %vm1082, %v1071
      %1090 = vst.msk [vmem:[#allocation2 + $0x38] sm:$0xff] %vm1082, %v1073
      %v1091 = vld [vmem:[%s1001] sm:$0x8]
      %v1092 = vld [vmem:[%s1001 + $0x4] sm:$0xf]
      %v1093 = vld [vmem:[%s1001 + $0x8] sm:$0x7]
      %v1094 = vld [vmem:[%s1001 + $0x10] sm:$0x8]
      %v1095 = vld [vmem:[%s1001 + $0x14] sm:$0xf]
      %v1096 = vld [vmem:[%s1001 + $0x18] sm:$0x7]
      %v1097 = vld [vmem:[%s1001 + $0x20] sm:$0x8]
      %v1098 = vld [vmem:[%s1001 + $0x24] sm:$0xf]
      %v1099 = vld [vmem:[%s1001 + $0x28] sm:$0x7]
      %v1100 = vld [vmem:[%s1001 + $0x30] sm:$0x8]
      %v1101 = vld [vmem:[%s1001 + $0x34] sm:$0xf]
      %v1102 = vld [vmem:[%s1001 + $0x38] sm:$0x7]
      %v1103 = vld [vmem:[%s1001 + $0x40] sm:$0x8]
      %v1104 = vld [vmem:[%s1001 + $0x44] sm:$0xf]
      %v1105 = vld [vmem:[%s1001 + $0x48] sm:$0x7]
      %v1106 = vld [vmem:[%s1001 + $0x50] sm:$0x8]
      %v1107 = vld [vmem:[%s1001 + $0x54] sm:$0xf]
      %v1108 = vld [vmem:[%s1001 + $0x58] sm:$0x7]
      %v1109 = vld [vmem:[%s1001 + $0x60] sm:$0x8]
      %v1110 = vld [vmem:[%s1001 + $0x64] sm:$0xf]
      %v1111 = vld [vmem:[%s1001 + $0x68] sm:$0x7]
      %v1112 = vld [vmem:[%s1001 + $0x70] sm:$0x8]
      %v1113 = vld [vmem:[%s1001 + $0x74] sm:$0xf]
      %v1114 = vld [vmem:[%s1001 + $0x78] sm:$0x7]
      %v1139 = vunpack.c.l.b16 %v1091
      %v1140 = vunpack.c.l.b16 %v1092
      %v1141 = vunpack.c.l.b16 %v1093
      %v1142 = vunpack.c.l.b16 %v1094
      %v1143 = vunpack.c.l.b16 %v1095
      %v1144 = vunpack.c.l.b16 %v1096
      %v1145 = vunpack.c.l.b16 %v1097
      %v1146 = vunpack.c.l.b16 %v1098
      %v1147 = vunpack.c.l.b16 %v1099
      %v1148 = vunpack.c.l.b16 %v1100
      %v1149 = vunpack.c.l.b16 %v1101
      %v1150 = vunpack.c.l.b16 %v1102
      %v1151 = vunpack.c.l.b16 %v1103
      %v1152 = vunpack.c.l.b16 %v1104
      %v1153 = vunpack.c.l.b16 %v1105
      %v1154 = vunpack.c.l.b16 %v1106
      %v1155 = vunpack.c.l.b16 %v1107
      %v1156 = vunpack.c.l.b16 %v1108
      %v1157 = vunpack.c.l.b16 %v1109
      %v1158 = vunpack.c.l.b16 %v1110
      %v1159 = vunpack.c.l.b16 %v1111
      %v1160 = vunpack.c.l.b16 %v1112
      %v1161 = vunpack.c.l.b16 %v1113
      %v1162 = vunpack.c.l.b16 %v1114
      %v1163 = vpack.c.b16 %v1140, %v1139
      %v1164 = vpack.c.b16 %v1141, %v1141
      %v1165 = vpack.c.b16 %v1143, %v1142
      %v1166 = vpack.c.b16 %v1144, %v1144
      %v1167 = vpack.c.b16 %v1146, %v1145
      %v1168 = vpack.c.b16 %v1147, %v1147
      %v1169 = vpack.c.b16 %v1149, %v1148
      %v1170 = vpack.c.b16 %v1150, %v1150
      %v1171 = vpack.c.b16 %v1152, %v1151
      %v1172 = vpack.c.b16 %v1153, %v1153
      %v1173 = vpack.c.b16 %v1155, %v1154
      %v1174 = vpack.c.b16 %v1156, %v1156
      %v1175 = vpack.c.b16 %v1158, %v1157
      %v1176 = vpack.c.b16 %v1159, %v1159
      %v1177 = vpack.c.b16 %v1161, %v1160
      %v1178 = vpack.c.b16 %v1162, %v1162
      %v1179 = vrot.slane %v1163, 3
      %v1180 = vrot.slane %v1164, 3
      %v1181 = vsel %vm417, %v1179, %v1180
      %v1182 = vrot.slane %v1165, 3
      %v1183 = vrot.slane %v1166, 3
      %v1184 = vsel %vm417, %v1182, %v1183
      %v1185 = vrot.slane %v1167, 3
      %v1186 = vrot.slane %v1168, 3
      %v1187 = vsel %vm417, %v1185, %v1186
      %v1188 = vrot.slane %v1169, 3
      %v1189 = vrot.slane %v1170, 3
      %v1190 = vsel %vm417, %v1188, %v1189
      %v1191 = vrot.slane %v1171, 3
      %v1192 = vrot.slane %v1172, 3
      %v1193 = vsel %vm417, %v1191, %v1192
      %v1194 = vrot.slane %v1173, 3
      %v1195 = vrot.slane %v1174, 3
      %v1196 = vsel %vm417, %v1194, %v1195
      %v1197 = vrot.slane %v1175, 3
      %v1198 = vrot.slane %v1176, 3
      %v1199 = vsel %vm417, %v1197, %v1198
      %v1200 = vrot.slane %v1177, 3
      %v1201 = vrot.slane %v1178, 3
      %v1202 = vsel %vm417, %v1200, %v1201
      %1203 = vrot.lane.b32.xlu0 %v1181, 28
      %v1204 = vpop.permute.xlu0 %1203
      %1205 = vrot.lane.b32.xlu0 %v1184, 28
      %v1206 = vpop.permute.xlu0 %1205
      %1207 = vrot.lane.b32.xlu0 %v1187, 28
      %v1208 = vpop.permute.xlu0 %1207
      %1209 = vrot.lane.b32.xlu0 %v1190, 28
      %v1210 = vpop.permute.xlu0 %1209
      %1211 = vrot.lane.b32.xlu0 %v1193, 28
      %v1212 = vpop.permute.xlu0 %1211
      %1213 = vrot.lane.b32.xlu0 %v1196, 28
      %v1214 = vpop.permute.xlu0 %1213
      %1215 = vrot.lane.b32.xlu0 %v1199, 28
      %v1216 = vpop.permute.xlu0 %1215
      %1217 = vrot.lane.b32.xlu0 %v1202, 28
      %v1218 = vpop.permute.xlu0 %1217
      %vm1227 = vcmask 261344
      %1228 = vst.msk [vmem:[#allocation2] sm:$0xff] %vm1227, %v1204
      %1229 = vst.msk [vmem:[#allocation2 + $0x8] sm:$0xff] %vm1227, %v1206
      %1230 = vst.msk [vmem:[#allocation2 + $0x10] sm:$0xff] %vm1227, %v1208
      %1231 = vst.msk [vmem:[#allocation2 + $0x18] sm:$0xff] %vm1227, %v1210
      %1232 = vst.msk [vmem:[#allocation2 + $0x20] sm:$0xff] %vm1227, %v1212
      %1233 = vst.msk [vmem:[#allocation2 + $0x28] sm:$0xff] %vm1227, %v1214
      %1234 = vst.msk [vmem:[#allocation2 + $0x30] sm:$0xff] %vm1227, %v1216
      %1235 = vst.msk [vmem:[#allocation2 + $0x38] sm:$0xff] %vm1227, %v1218
      %v1236 = vld [vmem:[%s1001 + $0x4] sm:$0xc]
      %v1237 = vld [vmem:[%s1001 + $0x8] sm:$0xf]
      %v1238 = vld [vmem:[%s1001 + $0xc] sm:$0x3]
      %v1239 = vld [vmem:[%s1001 + $0x14] sm:$0xc]
      %v1240 = vld [vmem:[%s1001 + $0x18] sm:$0xf]
      %v1241 = vld [vmem:[%s1001 + $0x1c] sm:$0x3]
      %v1242 = vld [vmem:[%s1001 + $0x24] sm:$0xc]
      %v1243 = vld [vmem:[%s1001 + $0x28] sm:$0xf]
      %v1244 = vld [vmem:[%s1001 + $0x2c] sm:$0x3]
      %v1245 = vld [vmem:[%s1001 + $0x34] sm:$0xc]
      %v1246 = vld [vmem:[%s1001 + $0x38] sm:$0xf]
      %v1247 = vld [vmem:[%s1001 + $0x3c] sm:$0x3]
      %v1248 = vld [vmem:[%s1001 + $0x44] sm:$0xc]
      %v1249 = vld [vmem:[%s1001 + $0x48] sm:$0xf]
      %v1250 = vld [vmem:[%s1001 + $0x4c] sm:$0x3]
      %v1251 = vld [vmem:[%s1001 + $0x54] sm:$0xc]
      %v1252 = vld [vmem:[%s1001 + $0x58] sm:$0xf]
      %v1253 = vld [vmem:[%s1001 + $0x5c] sm:$0x3]
      %v1254 = vld [vmem:[%s1001 + $0x64] sm:$0xc]
      %v1255 = vld [vmem:[%s1001 + $0x68] sm:$0xf]
      %v1256 = vld [vmem:[%s1001 + $0x6c] sm:$0x3]
      %v1257 = vld [vmem:[%s1001 + $0x74] sm:$0xc]
      %v1258 = vld [vmem:[%s1001 + $0x78] sm:$0xf]
      %v1259 = vld [vmem:[%s1001 + $0x7c] sm:$0x3]
      %v1284 = vunpack.c.l.b16 %v1236
      %v1285 = vunpack.c.l.b16 %v1237
      %v1286 = vunpack.c.l.b16 %v1238
      %v1287 = vunpack.c.l.b16 %v1239
      %v1288 = vunpack.c.l.b16 %v1240
      %v1289 = vunpack.c.l.b16 %v1241
      %v1290 = vunpack.c.l.b16 %v1242
      %v1291 = vunpack.c.l.b16 %v1243
      %v1292 = vunpack.c.l.b16 %v1244
      %v1293 = vunpack.c.l.b16 %v1245
      %v1294 = vunpack.c.l.b16 %v1246
      %v1295 = vunpack.c.l.b16 %v1247
      %v1296 = vunpack.c.l.b16 %v1248
      %v1297 = vunpack.c.l.b16 %v1249
      %v1298 = vunpack.c.l.b16 %v1250
      %v1299 = vunpack.c.l.b16 %v1251
      %v1300 = vunpack.c.l.b16 %v1252
      %v1301 = vunpack.c.l.b16 %v1253
      %v1302 = vunpack.c.l.b16 %v1254
      %v1303 = vunpack.c.l.b16 %v1255
      %v1304 = vunpack.c.l.b16 %v1256
      %v1305 = vunpack.c.l.b16 %v1257
      %v1306 = vunpack.c.l.b16 %v1258
      %v1307 = vunpack.c.l.b16 %v1259
      %v1308 = vpack.c.b16 %v1285, %v1284
      %v1309 = vpack.c.b16 %v1286, %v1286
      %v1310 = vpack.c.b16 %v1288, %v1287
      %v1311 = vpack.c.b16 %v1289, %v1289
      %v1312 = vpack.c.b16 %v1291, %v1290
      %v1313 = vpack.c.b16 %v1292, %v1292
      %v1314 = vpack.c.b16 %v1294, %v1293
      %v1315 = vpack.c.b16 %v1295, %v1295
      %v1316 = vpack.c.b16 %v1297, %v1296
      %v1317 = vpack.c.b16 %v1298, %v1298
      %v1318 = vpack.c.b16 %v1300, %v1299
      %v1319 = vpack.c.b16 %v1301, %v1301
      %v1320 = vpack.c.b16 %v1303, %v1302
      %v1321 = vpack.c.b16 %v1304, %v1304
      %v1322 = vpack.c.b16 %v1306, %v1305
      %v1323 = vpack.c.b16 %v1307, %v1307
      %v1324 = vrot.slane %v1308, 2
      %v1325 = vrot.slane %v1309, 2
      %v1326 = vsel %vm563, %v1324, %v1325
      %v1327 = vrot.slane %v1310, 2
      %v1328 = vrot.slane %v1311, 2
      %v1329 = vsel %vm563, %v1327, %v1328
      %v1330 = vrot.slane %v1312, 2
      %v1331 = vrot.slane %v1313, 2
      %v1332 = vsel %vm563, %v1330, %v1331
      %v1333 = vrot.slane %v1314, 2
      %v1334 = vrot.slane %v1315, 2
      %v1335 = vsel %vm563, %v1333, %v1334
      %v1336 = vrot.slane %v1316, 2
      %v1337 = vrot.slane %v1317, 2
      %v1338 = vsel %vm563, %v1336, %v1337
      %v1339 = vrot.slane %v1318, 2
      %v1340 = vrot.slane %v1319, 2
      %v1341 = vsel %vm563, %v1339, %v1340
      %v1342 = vrot.slane %v1320, 2
      %v1343 = vrot.slane %v1321, 2
      %v1344 = vsel %vm563, %v1342, %v1343
      %v1345 = vrot.slane %v1322, 2
      %v1346 = vrot.slane %v1323, 2
      %v1347 = vsel %vm563, %v1345, %v1346
      %1348 = vrot.lane.b32.xlu0 %v1326, 32
      %v1349 = vpop.permute.xlu0 %1348
      %1350 = vrot.lane.b32.xlu0 %v1329, 32
      %v1351 = vpop.permute.xlu0 %1350
      %1352 = vrot.lane.b32.xlu0 %v1332, 32
      %v1353 = vpop.permute.xlu0 %1352
      %1354 = vrot.lane.b32.xlu0 %v1335, 32
      %v1355 = vpop.permute.xlu0 %1354
      %1356 = vrot.lane.b32.xlu0 %v1338, 32
      %v1357 = vpop.permute.xlu0 %1356
      %1358 = vrot.lane.b32.xlu0 %v1341, 32
      %v1359 = vpop.permute.xlu0 %1358
      %1360 = vrot.lane.b32.xlu0 %v1344, 32
      %v1361 = vpop.permute.xlu0 %1360
      %1362 = vrot.lane.b32.xlu0 %v1347, 32
      %v1363 = vpop.permute.xlu0 %1362
      %vm1372 = vcmask 294144
      %1373 = vst.msk [vmem:[#allocation2] sm:$0xff] %vm1372, %v1349
      %1374 = vst.msk [vmem:[#allocation2 + $0x8] sm:$0xff] %vm1372, %v1351
      %1375 = vst.msk [vmem:[#allocation2 + $0x10] sm:$0xff] %vm1372, %v1353
      %1376 = vst.msk [vmem:[#allocation2 + $0x18] sm:$0xff] %vm1372, %v1355
      %1377 = vst.msk [vmem:[#allocation2 + $0x20] sm:$0xff] %vm1372, %v1357
      %1378 = vst.msk [vmem:[#allocation2 + $0x28] sm:$0xff] %vm1372, %v1359
      %1379 = vst.msk [vmem:[#allocation2 + $0x30] sm:$0xff] %vm1372, %v1361
      %1380 = vst.msk [vmem:[#allocation2 + $0x38] sm:$0xff] %vm1372, %v1363
      %v1381 = vld [vmem:[#allocation2] sm:$0xff]
      %v1382 = vld [vmem:[#allocation2 + $0x8] sm:$0xff]
      %v1383 = vld [vmem:[#allocation2 + $0x10] sm:$0xff]
      %v1384 = vld [vmem:[#allocation2 + $0x18] sm:$0xff]
      %v1385 = vld [vmem:[#allocation2 + $0x20] sm:$0xff]
      %v1386 = vld [vmem:[#allocation2 + $0x28] sm:$0xff]
      %v1387 = vld [vmem:[#allocation2 + $0x30] sm:$0xff]
      %v1388 = vld [vmem:[#allocation2 + $0x38] sm:$0xff]
      %v1389 = vld [vmem:[%s1] sm:$0xf]
      %v1390 = vld [vmem:[%s1 + $0x4] sm:$0xf]
      %v1391 = vld [vmem:[%s1 + $0x8] sm:$0xf]
      %v1392 = vld [vmem:[%s1 + $0xc] sm:$0xf]
      %v1393 = vld [vmem:[%s1 + $0x10] sm:$0x3]
      %v1394 = vld [vmem:[%s2] sm:$0x1]
      %v1396 = vlaneseq
      %v1397 = vshrl.u32 %v1396, 7
      %v1398 = vsub.s32 0, %v1397
      %v1399 = vrot.slane %v1394, %v1398
      %v1406 = vunpack.c.l.b16 %v1389
      %v1407 = vunpack.c.l.b16 %v1390
      %v1408 = vunpack.c.l.b16 %v1391
      %v1409 = vunpack.c.l.b16 %v1392
      %v1410 = vunpack.c.l.b16 %v1393
      %v1411 = vpack.c.b16 %v1407, %v1406
      %v1412 = vpack.c.b16 %v1409, %v1408
      %v1413 = vpack.c.b16 %v1410, %v1410
      %vm1416 = vcmask 293888
      %v1418 = vsel %vm1416, %v1381, 0
      %v1421 = vsel %vm1416, %v1382, 0
      %v1424 = vsel %vm1416, %v1383, 0
      %v1427 = vsel %vm1416, %v1384, 0
      %v1430 = vsel %vm1416, %v1385, 0
      %v1433 = vsel %vm1416, %v1386, 0
      %v1436 = vsel %vm1416, %v1387, 0
      %v1439 = vsel %vm1416, %v1388, 0
      %vm1441 = vcmask 1041408
      %v1443 = vsel %vm1441, %v1413, 0
      %1445 = vmatprep.subr.bf16.mxu0 0
      %1446 = vmatpush1.bf16.msra.mxu0 %v1411
      %1447 = vmatprep.subr.bf16.mxu0 0
      %1448 = vmatpush1.bf16.msra.mxu0 %v1412
      %1449 = vmatprep.subr.bf16.mxu0 0
      %1450 = vmatpush1.bf16.msra.mxu0 %v1443
      %1451 = vmatprep.subr.bf16.mxu0 0
      %1452 = vmatpush1.bf16.msra.mxu0 0
      %1453 = vmatprep.subr.bf16.mxu0 0
      %1454 = vmatpush1.bf16.msra.mxu0 0
      %1455 = vmatprep.subr.bf16.mxu0 0
      %1456 = vmatpush1.bf16.msra.mxu0 0
      %1457 = vmatprep.subr.bf16.mxu0 0
      %1458 = vmatpush1.bf16.msra.mxu0 0
      %1459 = vmatprep.subr.bf16.mxu0 0
      %1460 = vmatpush1.bf16.msra.mxu0 0
      %1461 = vmatprep.subr.bf16.mxu0 0
      %1462 = vmatpush1.bf16.msra.mxu0 0
      %1463 = vmatprep.subr.bf16.mxu0 0
      %1464 = vmatpush1.bf16.msra.mxu0 0
      %1465 = vmatprep.subr.bf16.mxu0 0
      %1466 = vmatpush1.bf16.msra.mxu0 0
      %1467 = vmatprep.subr.bf16.mxu0 0
      %1468 = vmatpush1.bf16.msra.mxu0 0
      %1469 = vmatprep.subr.bf16.mxu0 0
      %1470 = vmatpush1.bf16.msra.mxu0 0
      %1471 = vmatprep.subr.bf16.mxu0 0
      %1472 = vmatpush1.bf16.msra.mxu0 0
      %1473 = vmatprep.subr.bf16.mxu0 0
      %1474 = vmatpush1.bf16.msra.mxu0 0
      %1475 = vmatprep.subr.bf16.mxu0 0
      %1476 = vmatpush1.bf16.msra.mxu0 0
      %1477 = vmatprep.mubr.bf16.mxu0 0
      %1478 = vmatmul.mubr.bf16.gmra.mrb[0].mxu0 %v1418
      %v1479 = vpop.f32.mrb[0].mxu0
      %v1480 = vadd.f32 %v1399, %v1479
      %v1481 = vpop.f32.mrb[0].mxu0
      %v1482 = vpop.f32.mrb[0].mxu0
      %v1483 = vadd.f32 %v1399, %v1482
      %v1484 = vpop.f32.mrb[0].mxu0
      %1485 = vmatprep.mubr.bf16.mxu0 0
      %1486 = vmatmul.mubr.bf16.gmra.mrb[0].mxu0 %v1421
      %v1487 = vpop.f32.mrb[0].mxu0
      %v1488 = vadd.f32 %v1399, %v1487
      %v1489 = vpop.f32.mrb[0].mxu0
      %v1490 = vpop.f32.mrb[0].mxu0
      %v1491 = vadd.f32 %v1399, %v1490
      %v1492 = vpop.f32.mrb[0].mxu0
      %1493 = vmatprep.mubr.bf16.mxu0 0
      %1494 = vmatmul.mubr.bf16.gmra.mrb[0].mxu0 %v1424
      %v1495 = vpop.f32.mrb[0].mxu0
      %v1496 = vadd.f32 %v1399, %v1495
      %v1497 = vpop.f32.mrb[0].mxu0
      %v1498 = vpop.f32.mrb[0].mxu0
      %v1499 = vadd.f32 %v1399, %v1498
      %v1500 = vpop.f32.mrb[0].mxu0
      %1501 = vmatprep.mubr.bf16.mxu0 0
      %1502 = vmatmul.mubr.bf16.gmra.mrb[0].mxu0 %v1427
      %v1503 = vpop.f32.mrb[0].mxu0
      %v1504 = vadd.f32 %v1399, %v1503
      %v1505 = vpop.f32.mrb[0].mxu0
      %v1506 = vpop.f32.mrb[0].mxu0
      %v1507 = vadd.f32 %v1399, %v1506
      %v1508 = vpop.f32.mrb[0].mxu0
      %1509 = vmatprep.mubr.bf16.mxu0 0
      %1510 = vmatmul.mubr.bf16.gmra.mrb[0].mxu0 %v1430
      %v1511 = vpop.f32.mrb[0].mxu0
      %v1512 = vadd.f32 %v1399, %v1511
      %v1513 = vpop.f32.mrb[0].mxu0
      %v1514 = vpop.f32.mrb[0].mxu0
      %v1515 = vadd.f32 %v1399, %v1514
      %v1516 = vpop.f32.mrb[0].mxu0
      %1517 = vmatprep.mubr.bf16.mxu0 0
      %1518 = vmatmul.mubr.bf16.gmra.mrb[0].mxu0 %v1433
      %v1519 = vpop.f32.mrb[0].mxu0
      %v1520 = vadd.f32 %v1399, %v1519
      %v1521 = vpop.f32.mrb[0].mxu0
      %v1522 = vpop.f32.mrb[0].mxu0
      %v1523 = vadd.f32 %v1399, %v1522
      %v1524 = vpop.f32.mrb[0].mxu0
      %1525 = vmatprep.mubr.bf16.mxu0 0
      %1526 = vmatmul.mubr.bf16.gmra.mrb[0].mxu0 %v1436
      %v1527 = vpop.f32.mrb[0].mxu0
      %v1528 = vadd.f32 %v1399, %v1527
      %v1529 = vpop.f32.mrb[0].mxu0
      %v1530 = vpop.f32.mrb[0].mxu0
      %v1531 = vadd.f32 %v1399, %v1530
      %v1532 = vpop.f32.mrb[0].mxu0
      %1533 = vmatprep.mubr.bf16.mxu0 0
      %1534 = vmatmul.mubr.bf16.gmra.mrb[0].mxu0 %v1439
      %v1535 = vpop.f32.mrb[0].mxu0
      %v1536 = vadd.f32 %v1399, %v1535
      %v1537 = vpop.f32.mrb[0].mxu0
      %v1538 = vpop.f32.mrb[0].mxu0
      %v1539 = vadd.f32 %v1399, %v1538
      %v1540 = vpop.f32.mrb[0].mxu0
      %1541 = vdwg.mxu0
      %vm1542 = vcmask 64512
      %1543 = vst.msk [vmem:[%s246] sm:$0xff] %vm1542, %v1480
      %1544 = vst.msk [vmem:[%s246 + $0x8] sm:$0xff] %vm1542, %v1483
      %1545 = vst.msk [vmem:[%s246 + $0x10] sm:$0xff] %vm1542, %v1488
      %1546 = vst.msk [vmem:[%s246 + $0x18] sm:$0xff] %vm1542, %v1491
      %1547 = vst.msk [vmem:[%s246 + $0x20] sm:$0xff] %vm1542, %v1496
      %1548 = vst.msk [vmem:[%s246 + $0x28] sm:$0xff] %vm1542, %v1499
      %1549 = vst.msk [vmem:[%s246 + $0x30] sm:$0xff] %vm1542, %v1504
      %1550 = vst.msk [vmem:[%s246 + $0x38] sm:$0xff] %vm1542, %v1507
      %1551 = vst.msk [vmem:[%s246 + $0x40] sm:$0xff] %vm1542, %v1512
      %1552 = vst.msk [vmem:[%s246 + $0x48] sm:$0xff] %vm1542, %v1515
      %1553 = vst.msk [vmem:[%s246 + $0x50] sm:$0xff] %vm1542, %v1520
      %1554 = vst.msk [vmem:[%s246 + $0x58] sm:$0xff] %vm1542, %v1523
      %1555 = vst.msk [vmem:[%s246 + $0x60] sm:$0xff] %vm1542, %v1528
      %1556 = vst.msk [vmem:[%s246 + $0x68] sm:$0xff] %vm1542, %v1531
      %1557 = vst.msk [vmem:[%s246 + $0x70] sm:$0xff] %vm1542, %v1536
      %1558 = vst.msk [vmem:[%s246 + $0x78] sm:$0xff] %vm1542, %v1539
      %v1559 = vsel %vm1542, %v1480, 0.0
      %v1560 = vsel %vm1542, %v1483, 0.0
      %v1561 = vadd.f32 %v1559, %v1560
      %v1562 = vsel %vm1542, %v1488, 0.0
      %v1563 = vadd.f32 %v1561, %v1562
      %v1564 = vsel %vm1542, %v1491, 0.0
      %v1565 = vadd.f32 %v1563, %v1564
      %v1566 = vsel %vm1542, %v1496, 0.0
      %v1567 = vadd.f32 %v1565, %v1566
      %v1568 = vsel %vm1542, %v1499, 0.0
      %v1569 = vadd.f32 %v1567, %v1568
      %v1570 = vsel %vm1542, %v1504, 0.0
      %v1571 = vadd.f32 %v1569, %v1570
      %v1572 = vsel %vm1542, %v1507, 0.0
      %v1573 = vadd.f32 %v1571, %v1572
      %v1574 = vsel %vm1542, %v1512, 0.0
      %v1575 = vadd.f32 %v1573, %v1574
      %v1576 = vsel %vm1542, %v1515, 0.0
      %v1577 = vadd.f32 %v1575, %v1576
      %v1578 = vsel %vm1542, %v1520, 0.0
      %v1579 = vadd.f32 %v1577, %v1578
      %v1580 = vsel %vm1542, %v1523, 0.0
      %v1581 = vadd.f32 %v1579, %v1580
      %v1582 = vsel %vm1542, %v1528, 0.0
      %v1583 = vadd.f32 %v1581, %v1582
      %v1584 = vsel %vm1542, %v1531, 0.0
      %v1585 = vadd.f32 %v1583, %v1584
      %v1586 = vsel %vm1542, %v1536, 0.0
      %v1587 = vadd.f32 %v1585, %v1586
      %v1588 = vsel %vm1542, %v1539, 0.0
      %v1589 = vadd.f32 %v1587, %v1588
      %v1590 = vrot.slane %v1589, 4
      %v1591 = vadd.f32 %v1589, %v1590
      %v1592 = vrot.slane %v1591, 2
      %v1593 = vadd.f32 %v1591, %v1592
      %v1594 = vrot.slane %v1593, 1
      %v1595 = vadd.f32 %v1593, %v1594
      %vm1596 = vcmask 57344
      %1597 = vst.msk [vmem:[%s254] sm:$0x1] %vm1596, %v1595
      %v1598 = vmul.f32 %v1480, %v1480
      %v1599 = vmul.f32 %v1483, %v1483
      %v1600 = vmul.f32 %v1488, %v1488
      %v1601 = vmul.f32 %v1491, %v1491
      %v1602 = vmul.f32 %v1496, %v1496
      %v1603 = vmul.f32 %v1499, %v1499
      %v1604 = vmul.f32 %v1504, %v1504
      %v1605 = vmul.f32 %v1507, %v1507
      %v1606 = vmul.f32 %v1512, %v1512
      %v1607 = vmul.f32 %v1515, %v1515
      %v1608 = vmul.f32 %v1520, %v1520
      %v1609 = vmul.f32 %v1523, %v1523
      %v1610 = vmul.f32 %v1528, %v1528
      %v1611 = vmul.f32 %v1531, %v1531
      %v1612 = vmul.f32 %v1536, %v1536
      %v1613 = vmul.f32 %v1539, %v1539
      %v1614 = vsel %vm1542, %v1598, 0.0
      %v1615 = vsel %vm1542, %v1599, 0.0
      %v1616 = vadd.f32 %v1614, %v1615
      %v1617 = vsel %vm1542, %v1600, 0.0
      %v1618 = vadd.f32 %v1616, %v1617
      %v1619 = vsel %vm1542, %v1601, 0.0
      %v1620 = vadd.f32 %v1618, %v1619
      %v1621 = vsel %vm1542, %v1602, 0.0
      %v1622 = vadd.f32 %v1620, %v1621
      %v1623 = vsel %vm1542, %v1603, 0.0
      %v1624 = vadd.f32 %v1622, %v1623
      %v1625 = vsel %vm1542, %v1604, 0.0
      %v1626 = vadd.f32 %v1624, %v1625
      %v1627 = vsel %vm1542, %v1605, 0.0
      %v1628 = vadd.f32 %v1626, %v1627
      %v1629 = vsel %vm1542, %v1606, 0.0
      %v1630 = vadd.f32 %v1628, %v1629
      %v1631 = vsel %vm1542, %v1607, 0.0
      %v1632 = vadd.f32 %v1630, %v1631
      %v1633 = vsel %vm1542, %v1608, 0.0
      %v1634 = vadd.f32 %v1632, %v1633
      %v1635 = vsel %vm1542, %v1609, 0.0
      %v1636 = vadd.f32 %v1634, %v1635
      %v1637 = vsel %vm1542, %v1610, 0.0
      %v1638 = vadd.f32 %v1636, %v1637
      %v1639 = vsel %vm1542, %v1611, 0.0
      %v1640 = vadd.f32 %v1638, %v1639
      %v1641 = vsel %vm1542, %v1612, 0.0
      %v1642 = vadd.f32 %v1640, %v1641
      %v1643 = vsel %vm1542, %v1613, 0.0
      %v1644 = vadd.f32 %v1642, %v1643
      %v1645 = vrot.slane %v1644, 4
      %v1646 = vadd.f32 %v1644, %v1645
      %v1647 = vrot.slane %v1646, 2
      %v1648 = vadd.f32 %v1646, %v1647
      %v1649 = vrot.slane %v1648, 1
      %v1650 = vadd.f32 %v1648, %v1649
      %1651 = vst.msk [vmem:[%s254 + $0x1] sm:$0x1] %vm1596, %v1650
      %p1652 = scmp.lt.s32.totalorder %s20, 1
      %s1653 = scalar_select %p1652, %s20, 1
      %p1654 = scmp.lt.s32.totalorder %s21, 1
      %s1655 = scalar_select %p1654, %s21, 1
      %s1656 = smul.addr %s1655, 16
      %s1657 = smul.addr %s1653, 32
      %s1658 = sadd.s32 %s1656, %s1657
      %s1659 = smul.addr %s1658, 8
      %s1660 = scalar_lea.vmem %s3, %s1659
      %p1661 = scmp.lt.s32.totalorder %s20, 1
      %s1662 = scalar_select %p1661, %s20, 1
      %p1663 = scmp.lt.s32.totalorder %s21, 1
      %s1664 = scalar_select %p1663, %s21, 1
      %s1665 = smul.addr %s1662, 2
      %s1666 = sadd.s32 %s1664, %s1665
      %s1667 = smul.addr %s1666, 2
      %s1668 = scalar_lea.vmem %s4, %s1667
      // Predicated region
      $region33: #{pyramid_dilation_conv.2} parent=31 // pred_check
        %p1669 = pneg %p118
      $region34: #{pyramid_dilation_conv.2} parent=31 // pred_check_branch
        %1671 = sbr.rel (%p1669) target = $region36
      $region35: #{pyramid_dilation_conv.2} parent=31 // pred_region
        _
      $region36: #{pyramid_dilation_conv.2} parent=31 // pred_fallthru
        _
      // Predicated region
      $region37: #{pyramid_dilation_conv.2} parent=31 // pred_check
        %p1672 = pneg %p146
      $region38: #{pyramid_dilation_conv.2} parent=31 // pred_check_branch
        %1674 = sbr.rel (%p1672) target = $region40
      $region39: #{pyramid_dilation_conv.2} parent=31 // pred_region
        _
      $region40: #{pyramid_dilation_conv.2} parent=31 // pred_fallthru
        _
    $region32: #{pyramid_dilation_conv.2} parent=5 // pred_fallthru
      _
    %p1675 = scmp.le.s32.totalorder 2, %s11
    // Predicated region
    $region41: #{pyramid_dilation_conv.2} parent=5 // pred_check
      %p1676 = pneg %p1675
    $region42: #{pyramid_dilation_conv.2} parent=5 // pred_check_branch
      %1678 = sbr.rel (%p1676) target = $region44
    $region43: #{pyramid_dilation_conv.2} parent=5 // pred_region
      %s1679 = ssub.s32 %s11, 2
      // Predicated region
      $region45: #{pyramid_dilation_conv.2} parent=43 // pred_check
        %p1680 = pneg %p124
      $region46: #{pyramid_dilation_conv.2} parent=43 // pred_check_branch
        %1682 = sbr.rel (%p1680) target = $region48
      $region47: #{pyramid_dilation_conv.2} parent=43 // pred_region
        %p1683 = scmp.lt.s32.totalorder %s22, 1
        %s1684 = scalar_select %p1683, %s22, 1
        %p1685 = scmp.lt.s32.totalorder %s23, 1
        %s1686 = scalar_select %p1685, %s23, 1
        %s1687 = smul.addr %s1686, 16
        %s1688 = smul.addr %s1684, 32
        %s1689 = sadd.s32 %s1687, %s1688
        %s1690 = smul.addr %s1689, 8
        %s1691 = scalar_lea.vmem %s3, %s1690
      $region48: #{pyramid_dilation_conv.2} parent=43 // pred_fallthru
        _
      // Predicated region
      $region49: #{pyramid_dilation_conv.2} parent=43 // pred_check
        %p1692 = pneg %p152
      $region50: #{pyramid_dilation_conv.2} parent=43 // pred_check_branch
        %1694 = sbr.rel (%p1692) target = $region52
      $region51: #{pyramid_dilation_conv.2} parent=43 // pred_region
        %p1695 = scmp.lt.s32.totalorder %s22, 1
        %s1696 = scalar_select %p1695, %s22, 1
        %p1697 = scmp.lt.s32.totalorder %s23, 1
        %s1698 = scalar_select %p1697, %s23, 1
        %s1699 = smul.addr %s1696, 2
        %s1700 = sadd.s32 %s1698, %s1699
        %s1701 = smul.addr %s1700, 2
        %s1702 = scalar_lea.vmem %s4, %s1701
      $region52: #{pyramid_dilation_conv.2} parent=43 // pred_fallthru
        _
    $region44: #{pyramid_dilation_conv.2} parent=5 // pred_fallthru
      _
  $region6: #{pyramid_dilation_conv.2} parent=0 // loop_footer
    %s15 = sadd.s32 1, %s11
  $region7: #{pyramid_dilation_conv.2} parent=0 // loop_footer_branch
    %10 = sbr.rel target = $region3
  $region8: #{pyramid_dilation_conv.2} parent=0 // loop_exit
    _

</llo_original>
